<compile_context>
chip_gen: v5e
topology: v5e:2x2
jax: 0.10.0
libtpu: 0.0.40
codegen_flags: <defaults>
</compile_context>

<pallas_src>
import math

import jax
import jax.numpy as jnp
from jax import lax
from jax.experimental import pallas as pl
from jax.experimental.pallas import tpu as pltpu

_INV_SQRT2 = 1.0 / math.sqrt(2.0)


def _gelu_exact(x):
    # PyTorch nn.GELU() default: exact erf formulation.
    return 0.5 * x * (1.0 + lax.erf(x * _INV_SQRT2))


def critic_kernel(x_ref, w1_ref, b1_ref, w2_ref, b2_ref, w3_ref, b3_ref, o_ref):
    # Feature-major: every activation is (features, batch_tile); batch -> lanes.
    x = x_ref[...]                                                   # (obs_dim, TB)

    # Layer 1: Linear(obs_dim -> 128) + GELU
    h1 = jnp.dot(w1_ref[...], x, preferred_element_type=jnp.float32) + b1_ref[...]
    h1 = _gelu_exact(h1)                                             # (128, TB)

    # Layer 2: Linear(128 -> 128) + GELU
    h2 = jnp.dot(w2_ref[...], h1, preferred_element_type=jnp.float32) + b2_ref[...]
    h2 = _gelu_exact(h2)                                             # (128, TB)

    # Layer 3: Linear(128 -> 1); bias is a scalar read from SMEM.
    out = jnp.dot(w3_ref[...], h2, preferred_element_type=jnp.float32) + b3_ref[0, 0]
    o_ref[...] = out.astype(o_ref.dtype)                             # (1, TB)


def critic_forward(x, params, *, tb=512):
    """x: (B, obs_dim) float32 -> (B, 1) float32."""
    w1, b1, w2, b2, w3, b3 = params
    B, obs_dim = x.shape
    hidden = w1.shape[0]

    # Batch maps to lanes -> batch tile must be a multiple of 128.
    b_lane = pl.cdiv(B, 128) * 128
    TB = min(max(tb, 128) // 128 * 128, b_lane)
    B_pad = pl.cdiv(B, TB) * TB
    num_tiles = B_pad // TB

    # (obs_dim, B_pad) feature-major input; padded batch columns are zeros and
    # are sliced away after the call.
    xt = jnp.pad(x.T, ((0, 0), (0, B_pad - B)))

    const = lambda i: (0, 0)
    grid_spec = pltpu.PrefetchScalarGridSpec(
        num_scalar_prefetch=0,
        grid=(num_tiles,),
        in_specs=[
            pl.BlockSpec((obs_dim, TB), lambda i: (0, i)),          # x tile
            pl.BlockSpec((hidden, obs_dim), const),                 # W1 (resident)
            pl.BlockSpec((hidden, 1), const),                       # b1 (resident)
            pl.BlockSpec((hidden, hidden), const),                  # W2 (resident)
            pl.BlockSpec((hidden, 1), const),                       # b2 (resident)
            pl.BlockSpec((1, hidden), const),                       # W3 (resident)
            pl.BlockSpec(memory_space=pltpu.MemorySpace.SMEM),      # b3 scalar
        ],
        out_specs=pl.BlockSpec((1, TB), lambda i: (0, i)),          # lane-dense out
    )

    out = pl.pallas_call(
        critic_kernel,
        out_shape=jax.ShapeDtypeStruct((1, B_pad), jnp.float32),
        grid_spec=grid_spec,
        compiler_params=pltpu.CompilerParams(
            dimension_semantics=("parallel",),
        ),
    )(xt, w1, b1, w2, b2, w3, b3)

    return out[0, :B].reshape(B, 1)


def init_params(key, obs_dim, hidden=128):
    """Deterministic init mimicking PyTorch's default Linear init.
    Weights are stored PyTorch-style as (out_features, in_features); biases as
    column vectors (out_features, 1) so they broadcast along lanes (batch)."""
    ks = jax.random.split(key, 6)

    def linear(kw, kb, fan_in, fan_out):
        bound = 1.0 / math.sqrt(fan_in)
        w = jax.random.uniform(kw, (fan_out, fan_in), jnp.float32, -bound, bound)
        b = jax.random.uniform(kb, (fan_out, 1), jnp.float32, -bound, bound)
        return w, b

    w1, b1 = linear(ks[0], ks[1], obs_dim, hidden)
    w2, b2 = linear(ks[2], ks[3], hidden, hidden)
    w3, b3 = linear(ks[4], ks[5], hidden, 1)
    return (w1, b1, w2, b2, w3, b3)


def _reference(x, params):
    w1, b1, w2, b2, w3, b3 = params
    h1 = jax.nn.gelu(x @ w1.T + b1[:, 0], approximate=False)
    h2 = jax.nn.gelu(h1 @ w2.T + b2[:, 0], approximate=False)
    return h2 @ w3.T + b3[:, 0]


if __name__ == "__main__":
    key = jax.random.PRNGKey(0)
    k_x, k_p, k_x2 = jax.random.split(key, 3)

    B, OBS_DIM = 8, 4  # small env observation, e.g. CartPole-like
    x = jax.random.normal(k_x, (B, OBS_DIM), dtype=jnp.float32)
    params = init_params(k_p, OBS_DIM)

    out = jax.block_until_ready(critic_forward(x, params))
    ref = _reference(x, params)
    assert out.shape == (B, 1)
    assert jnp.allclose(out, ref, atol=1e-4, rtol=1e-4), (out, ref)

    # Exercise the batch grid + tail padding path (B not a multiple of TB).
    B2 = 300
    x2 = jax.random.normal(k_x2, (B2, OBS_DIM), dtype=jnp.float32)
    out2 = jax.block_until_ready(critic_forward(x2, params, tb=128))
    ref2 = _reference(x2, params)
    assert out2.shape == (B2, 1)
    assert jnp.allclose(out2, ref2, atol=1e-4, rtol=1e-4)

    print("KERNEL_OK")
</pallas_src>

<mosaic_0001>
module attributes {stable_mosaic.version = 11 : i64} {
  func.func @critic_kernel(%arg0: i32, %arg1: memref<4x128xf32, #tpu.memory_space<vmem>>, %arg2: memref<128x4xf32, #tpu.memory_space<vmem>>, %arg3: memref<128x1xf32, #tpu.memory_space<vmem>>, %arg4: memref<128x128xf32, #tpu.memory_space<vmem>>, %arg5: memref<128x1xf32, #tpu.memory_space<vmem>>, %arg6: memref<1x128xf32, #tpu.memory_space<vmem>>, %arg7: memref<1x1xf32, #tpu.memory_space<smem>>, %arg8: memref<1x128xf32, #tpu.memory_space<vmem>>) attributes {dimension_semantics = [#tpu.dimension_semantics<parallel>], iteration_bounds = array<i64: 1>, scalar_prefetch = 0 : i64, scratch_operands = 0 : i64, tpu.core_type = #tpu.core_type<tc>, window_params = [{transform_indices = @transform_0, window_bounds = array<i64: 4, 128>}, {pipeline_mode = #tpu.pipeline_mode<synchronous>, transform_indices = @transform_1, window_bounds = array<i64: 128, 4>}, {pipeline_mode = #tpu.pipeline_mode<synchronous>, transform_indices = @transform_2, window_bounds = array<i64: 128, 1>}, {pipeline_mode = #tpu.pipeline_mode<synchronous>, transform_indices = @transform_3, window_bounds = array<i64: 128, 128>}, {pipeline_mode = #tpu.pipeline_mode<synchronous>, transform_indices = @transform_4, window_bounds = array<i64: 128, 1>}, {pipeline_mode = #tpu.pipeline_mode<synchronous>, transform_indices = @transform_5, window_bounds = array<i64: 1, 128>}, {transform_indices = @transform_6, window_bounds = array<i64: 1, 1>}, {transform_indices = @transform_7, window_bounds = array<i64: 1, 128>}]} {
    %c0 = arith.constant 0 : index
    %c0_0 = arith.constant 0 : index
    %0 = vector.load %arg1[%c0, %c0_0] : memref<4x128xf32, #tpu.memory_space<vmem>>, vector<4x128xf32>
    %c0_1 = arith.constant 0 : index
    %c0_2 = arith.constant 0 : index
    %1 = vector.load %arg2[%c0_1, %c0_2] : memref<128x4xf32, #tpu.memory_space<vmem>>, vector<128x4xf32>
    %cst = arith.constant dense<0.000000e+00> : vector<128x128xf32>
    %2 = tpu.matmul %1, %0, %cst {dimension_numbers = #tpu.dot_dimension_numbers<[1], [0], [0], [1], [0, 0, 1, 1], [], []>} : vector<128x4xf32>, vector<4x128xf32>, vector<128x128xf32> -> vector<128x128xf32>
    %c0_3 = arith.constant 0 : index
    %c0_4 = arith.constant 0 : index
    %3 = vector.load %arg3[%c0_3, %c0_4] : memref<128x1xf32, #tpu.memory_space<vmem>>, vector<128x1xf32>
    %4 = vector.broadcast %3 : vector<128x1xf32> to vector<128x128xf32>
    %5 = arith.addf %2, %4 : vector<128x128xf32>
    %cst_5 = arith.constant 5.000000e-01 : f32
    %6 = vector.broadcast %cst_5 : f32 to vector<128x128xf32>
    %7 = arith.mulf %6, %5 : vector<128x128xf32>
    %cst_6 = arith.constant 0.707106769 : f32
    %8 = vector.broadcast %cst_6 : f32 to vector<128x128xf32>
    %9 = arith.mulf %5, %8 : vector<128x128xf32>
    %10 = math.erf %9 : vector<128x128xf32>
    %cst_7 = arith.constant 1.000000e+00 : f32
    %11 = vector.broadcast %cst_7 : f32 to vector<128x128xf32>
    %12 = arith.addf %11, %10 : vector<128x128xf32>
    %13 = arith.mulf %7, %12 : vector<128x128xf32>
    %c0_8 = arith.constant 0 : index
    %c0_9 = arith.constant 0 : index
    %14 = vector.load %arg4[%c0_8, %c0_9] : memref<128x128xf32, #tpu.memory_space<vmem>>, vector<128x128xf32>
    %cst_10 = arith.constant dense<0.000000e+00> : vector<128x128xf32>
    %15 = tpu.matmul %14, %13, %cst_10 {dimension_numbers = #tpu.dot_dimension_numbers<[1], [0], [0], [1], [0, 0, 1, 1], [], []>} : vector<128x128xf32>, vector<128x128xf32>, vector<128x128xf32> -> vector<128x128xf32>
    %c0_11 = arith.constant 0 : index
    %c0_12 = arith.constant 0 : index
    %16 = vector.load %arg5[%c0_11, %c0_12] : memref<128x1xf32, #tpu.memory_space<vmem>>, vector<128x1xf32>
    %17 = vector.broadcast %16 : vector<128x1xf32> to vector<128x128xf32>
    %18 = arith.addf %15, %17 : vector<128x128xf32>
    %cst_13 = arith.constant 5.000000e-01 : f32
    %19 = vector.broadcast %cst_13 : f32 to vector<128x128xf32>
    %20 = arith.mulf %19, %18 : vector<128x128xf32>
    %cst_14 = arith.constant 0.707106769 : f32
    %21 = vector.broadcast %cst_14 : f32 to vector<128x128xf32>
    %22 = arith.mulf %18, %21 : vector<128x128xf32>
    %23 = math.erf %22 : vector<128x128xf32>
    %cst_15 = arith.constant 1.000000e+00 : f32
    %24 = vector.broadcast %cst_15 : f32 to vector<128x128xf32>
    %25 = arith.addf %24, %23 : vector<128x128xf32>
    %26 = arith.mulf %20, %25 : vector<128x128xf32>
    %c0_16 = arith.constant 0 : index
    %c0_17 = arith.constant 0 : index
    %27 = vector.load %arg6[%c0_16, %c0_17] : memref<1x128xf32, #tpu.memory_space<vmem>>, vector<1x128xf32>
    %cst_18 = arith.constant dense<0.000000e+00> : vector<1x128xf32>
    %28 = tpu.matmul %27, %26, %cst_18 {dimension_numbers = #tpu.dot_dimension_numbers<[1], [0], [0], [1], [0, 0, 1, 1], [], []>} : vector<1x128xf32>, vector<128x128xf32>, vector<1x128xf32> -> vector<1x128xf32>
    %c0_19 = arith.constant 0 : index
    %c0_20 = arith.constant 0 : index
    %29 = memref.load %arg7[%c0_19, %c0_20] : memref<1x1xf32, #tpu.memory_space<smem>>
    %30 = vector.broadcast %29 : f32 to vector<1x128xf32>
    %31 = arith.addf %28, %30 : vector<1x128xf32>
    %c0_21 = arith.constant 0 : index
    %c0_22 = arith.constant 0 : index
    %32 = vector.load %arg8[%c0_21, %c0_22] : memref<1x128xf32, #tpu.memory_space<vmem>>, vector<1x128xf32>
    tpu.vector_store %arg8[%c0_21, %c0_22], %31 {strides = array<i32>} : memref<1x128xf32, #tpu.memory_space<vmem>>, vector<1x128xf32>,
    return
  }
  func.func @transform_0(%arg0: i32) -> (i32, i32) {
    %c0_i32 = arith.constant 0 : i32
    %c0_i32_0 = arith.constant 0 : i32
    return %c0_i32, %arg0 : i32, i32
  }
  func.func @transform_1(%arg0: i32) -> (i32, i32) {
    %c0_i32 = arith.constant 0 : i32
    %c0_i32_0 = arith.constant 0 : i32
    %c0_i32_1 = arith.constant 0 : i32
    return %c0_i32, %c0_i32_0 : i32, i32
  }
  func.func @transform_2(%arg0: i32) -> (i32, i32) {
    %c0_i32 = arith.constant 0 : i32
    %c0_i32_0 = arith.constant 0 : i32
    %c0_i32_1 = arith.constant 0 : i32
    return %c0_i32, %c0_i32_0 : i32, i32
  }
  func.func @transform_3(%arg0: i32) -> (i32, i32) {
    %c0_i32 = arith.constant 0 : i32
    %c0_i32_0 = arith.constant 0 : i32
    %c0_i32_1 = arith.constant 0 : i32
    return %c0_i32, %c0_i32_0 : i32, i32
  }
  func.func @transform_4(%arg0: i32) -> (i32, i32) {
    %c0_i32 = arith.constant 0 : i32
    %c0_i32_0 = arith.constant 0 : i32
    %c0_i32_1 = arith.constant 0 : i32
    return %c0_i32, %c0_i32_0 : i32, i32
  }
  func.func @transform_5(%arg0: i32) -> (i32, i32) {
    %c0_i32 = arith.constant 0 : i32
    %c0_i32_0 = arith.constant 0 : i32
    %c0_i32_1 = arith.constant 0 : i32
    return %c0_i32, %c0_i32_0 : i32, i32
  }
  func.func @transform_6(%arg0: i32) -> (i32, i32) {
    %c0_i32 = arith.constant 0 : i32
    %c0_i32_0 = arith.constant 0 : i32
    %c0_i32_1 = arith.constant 0 : i32
    return %c0_i32, %c0_i32_0 : i32, i32
  }
  func.func @transform_7(%arg0: i32) -> (i32, i32) {
    %c0_i32 = arith.constant 0 : i32
    %c0_i32_0 = arith.constant 0 : i32
    return %c0_i32, %arg0 : i32, i32
  }
}

</mosaic_0001>

<llo_original>
// kernel: tpu_custom_call.1
$region0: #{tpu_custom_call.1}
  #allocation0 [shape = 'u32[]', space=smem, size = 0x4, offset = 0x4, fixed_abs, tag = 'smem constant byte address 0x4 - core index']
  #allocation1 [shape = 'u32[72,128]{1,0:T(1,128)}', space=vmem, size = 0x9000, scoped, tag = 'internal scratch']
  #allocation2 [shape = 'f32[1,1]{1,0:T(1,128)S(6)}', space=smem, size = 0x200, scoped, tag = 'scoped memory for tpu_custom_call.1']
  %s0 = inlined_call_operand.vmem [shape: f32[4,128], index: 0, kind: input, shape index: {}]
  %s1 = inlined_call_operand.vmem [shape: f32[128,4], index: 1, kind: input, shape index: {}]
  %s2 = inlined_call_operand.vmem [shape: f32[128,1], index: 2, kind: input, shape index: {}]
  %s3 = inlined_call_operand.vmem [shape: f32[128,128], index: 3, kind: input, shape index: {}]
  %s4 = inlined_call_operand.vmem [shape: f32[128,1], index: 4, kind: input, shape index: {}]
  %s5 = inlined_call_operand.vmem [shape: f32[1,128], index: 5, kind: input, shape index: {}]
  %s6 = inlined_call_operand.<no memory space> [shape: f32[1,1], index: 6, kind: input, shape index: {}]
  %s7 = inlined_call_operand.hbm [shape: f32[1,128], index: 7, kind: output, shape index: {}]
  %s8 = sld [smem:[#allocation0]]
  $region38: #{tpu_custom_call.1} parent=0
    _
  %s10 = ssub.s32 1, %s8
  %s11 = scalar_select 0, %s10, %s8
  %12 = sst [smem:[#allocation2]] %s6
  $region1: #{tpu_custom_call.1} parent=0
    #allocation3 [shape = 'u8[512]{0}', space=vmem, size = 0x400, scoped, tag = 'output window, operand 0, single buffered']
    #allocation4 [shape = 's32[1]{0}', space=sflag, size = 0x4, scoped, tag = 'scoped memory for tpu_custom_call.1']
    %13 = vsyncpa [#allocation4], 0
    // Predicated region
    $region2: #{tpu_custom_call.1} parent=1 // pred_check
      _
    $region3: #{tpu_custom_call.1} parent=1 // pred_check_branch
      %15 = sbr.rel (0) target = $region5
    $region4: #{tpu_custom_call.1} parent=1 // pred_region
      _
    $region5: #{tpu_custom_call.1} parent=1 // pred_fallthru
      _
    // Predicated region
    $region6: #{tpu_custom_call.1} parent=1 // pred_check
      _
    $region7: #{tpu_custom_call.1} parent=1 // pred_check_branch
      %17 = sbr.rel (0) target = $region9
    $region8: #{tpu_custom_call.1} parent=1 // pred_region
      _
    $region9: #{tpu_custom_call.1} parent=1 // pred_fallthru
      _
    // Predicated region
    $region10: #{tpu_custom_call.1} parent=1 // pred_check
      _
    $region11: #{tpu_custom_call.1} parent=1 // pred_check_branch
      %19 = sbr.rel (0) target = $region13
    $region12: #{tpu_custom_call.1} parent=1 // pred_region
      _
    $region13: #{tpu_custom_call.1} parent=1 // pred_fallthru
      _
    // Predicated region
    $region14: #{tpu_custom_call.1} parent=1 // pred_check
      _
    $region15: #{tpu_custom_call.1} parent=1 // pred_check_branch
      %21 = sbr.rel (0) target = $region17
    $region16: #{tpu_custom_call.1} parent=1 // pred_region
      _
    $region17: #{tpu_custom_call.1} parent=1 // pred_fallthru
      _
    // Predicated region
    $region18: #{tpu_custom_call.1} parent=1 // pred_check
      _
    $region19: #{tpu_custom_call.1} parent=1 // pred_check_branch
      %23 = sbr.rel (0) target = $region21
    $region20: #{tpu_custom_call.1} parent=1 // pred_region
      _
    $region21: #{tpu_custom_call.1} parent=1 // pred_fallthru
      _
    // Predicated region
    $region22: #{tpu_custom_call.1} parent=1 // pred_check
      _
    $region23: #{tpu_custom_call.1} parent=1 // pred_check_branch
      %25 = sbr.rel (0) target = $region25
    $region24: #{tpu_custom_call.1} parent=1 // pred_region
      _
    $region25: #{tpu_custom_call.1} parent=1 // pred_fallthru
      _
    // Predicated region
    $region26: #{tpu_custom_call.1} parent=1 // pred_check
      _
    $region27: #{tpu_custom_call.1} parent=1 // pred_check_branch
      %27 = sbr.rel (0) target = $region29
    $region28: #{tpu_custom_call.1} parent=1 // pred_region
      _
    $region29: #{tpu_custom_call.1} parent=1 // pred_fallthru
      _
    %v28 = vld [vmem:[%s0] sm:$0xf]
    %v29 = vld [vmem:[%s1] sm:$0xff]
    %v30 = vld [vmem:[%s1 + $0x8] sm:$0xff]
    %v31 = vld [vmem:[%s1 + $0x10] sm:$0xff]
    %v32 = vld [vmem:[%s1 + $0x18] sm:$0xff]
    %v33 = vld [vmem:[%s1 + $0x20] sm:$0xff]
    %v34 = vld [vmem:[%s1 + $0x28] sm:$0xff]
    %v35 = vld [vmem:[%s1 + $0x30] sm:$0xff]
    %v36 = vld [vmem:[%s1 + $0x38] sm:$0xff]
    %v37 = vld [vmem:[%s1 + $0x40] sm:$0xff]
    %v38 = vld [vmem:[%s1 + $0x48] sm:$0xff]
    %v39 = vld [vmem:[%s1 + $0x50] sm:$0xff]
    %v40 = vld [vmem:[%s1 + $0x58] sm:$0xff]
    %v41 = vld [vmem:[%s1 + $0x60] sm:$0xff]
    %v42 = vld [vmem:[%s1 + $0x68] sm:$0xff]
    %v43 = vld [vmem:[%s1 + $0x70] sm:$0xff]
    %v44 = vld [vmem:[%s1 + $0x78] sm:$0xff]
    %v45 = vld [vmem:[%s2] sm:$0xff]
    %v46 = vld [vmem:[%s2 + $0x8] sm:$0xff]
    %v47 = vld [vmem:[%s2 + $0x10] sm:$0xff]
    %v48 = vld [vmem:[%s2 + $0x18] sm:$0xff]
    %v49 = vld [vmem:[%s2 + $0x20] sm:$0xff]
    %v50 = vld [vmem:[%s2 + $0x28] sm:$0xff]
    %v51 = vld [vmem:[%s2 + $0x30] sm:$0xff]
    %v52 = vld [vmem:[%s2 + $0x38] sm:$0xff]
    %v53 = vld [vmem:[%s2 + $0x40] sm:$0xff]
    %v54 = vld [vmem:[%s2 + $0x48] sm:$0xff]
    %v55 = vld [vmem:[%s2 + $0x50] sm:$0xff]
    %v56 = vld [vmem:[%s2 + $0x58] sm:$0xff]
    %v57 = vld [vmem:[%s2 + $0x60] sm:$0xff]
    %v58 = vld [vmem:[%s2 + $0x68] sm:$0xff]
    %v59 = vld [vmem:[%s2 + $0x70] sm:$0xff]
    %v60 = vld [vmem:[%s2 + $0x78] sm:$0xff]
    %62 = vset.pattern.permute.xlu0 0
    %63 = vperm.xlu0 %62, %v45
    %v64 = vpop.permute.xlu0 %63
    %67 = vset.pattern.permute.xlu0 0
    %68 = vperm.xlu0 %67, %v46
    %v69 = vpop.permute.xlu0 %68
    %72 = vset.pattern.permute.xlu0 0
    %73 = vperm.xlu0 %72, %v47
    %v74 = vpop.permute.xlu0 %73
    %77 = vset.pattern.permute.xlu0 0
    %78 = vperm.xlu0 %77, %v48
    %v79 = vpop.permute.xlu0 %78
    %82 = vset.pattern.permute.xlu0 0
    %83 = vperm.xlu0 %82, %v49
    %v84 = vpop.permute.xlu0 %83
    %87 = vset.pattern.permute.xlu0 0
    %88 = vperm.xlu0 %87, %v50
    %v89 = vpop.permute.xlu0 %88
    %92 = vset.pattern.permute.xlu0 0
    %93 = vperm.xlu0 %92, %v51
    %v94 = vpop.permute.xlu0 %93
    %97 = vset.pattern.permute.xlu0 0
    %98 = vperm.xlu0 %97, %v52
    %v99 = vpop.permute.xlu0 %98
    %102 = vset.pattern.permute.xlu0 0
    %103 = vperm.xlu0 %102, %v53
    %v104 = vpop.permute.xlu0 %103
    %107 = vset.pattern.permute.xlu0 0
    %108 = vperm.xlu0 %107, %v54
    %v109 = vpop.permute.xlu0 %108
    %112 = vset.pattern.permute.xlu0 0
    %113 = vperm.xlu0 %112, %v55
    %v114 = vpop.permute.xlu0 %113
    %117 = vset.pattern.permute.xlu0 0
    %118 = vperm.xlu0 %117, %v56
    %v119 = vpop.permute.xlu0 %118
    %122 = vset.pattern.permute.xlu0 0
    %123 = vperm.xlu0 %122, %v57
    %v124 = vpop.permute.xlu0 %123
    %127 = vset.pattern.permute.xlu0 0
    %128 = vperm.xlu0 %127, %v58
    %v129 = vpop.permute.xlu0 %128
    %132 = vset.pattern.permute.xlu0 0
    %133 = vperm.xlu0 %132, %v59
    %v134 = vpop.permute.xlu0 %133
    %137 = vset.pattern.permute.xlu0 0
    %138 = vperm.xlu0 %137, %v60
    %v139 = vpop.permute.xlu0 %138
    %vm141 = vcmask 31744
    %v143 = vsel %vm141, %v29, 0
    %v146 = vsel %vm141, %v30, 0
    %v149 = vsel %vm141, %v31, 0
    %v152 = vsel %vm141, %v32, 0
    %v155 = vsel %vm141, %v33, 0
    %v158 = vsel %vm141, %v34, 0
    %v161 = vsel %vm141, %v35, 0
    %v164 = vsel %vm141, %v36, 0
    %v167 = vsel %vm141, %v37, 0
    %v170 = vsel %vm141, %v38, 0
    %v173 = vsel %vm141, %v39, 0
    %v176 = vsel %vm141, %v40, 0
    %v179 = vsel %vm141, %v41, 0
    %v182 = vsel %vm141, %v42, 0
    %v185 = vsel %vm141, %v43, 0
    %v188 = vsel %vm141, %v44, 0
    %vm190 = vcmask 1043456
    %v192 = vsel %vm190, %v28, 0
    %194 = vmatpush.msra.mxu0 0.0
    %195 = vmatpush.msra.mxu0 0.0
    %196 = vmatpush.msra.mxu0 0.0
    %197 = vmatpush.msra.mxu0 0.0
    %198 = vmatpush.msra.mxu0 0.0
    %199 = vmatpush.msra.mxu0 0.0
    %200 = vmatpush.msra.mxu0 0.0
    %201 = vmatpush.msra.mxu0 0.0
    %202 = vmatpush.msra.mxu0 0.0
    %203 = vmatpush.msra.mxu0 0.0
    %204 = vmatpush.msra.mxu0 0.0
    %205 = vmatpush.msra.mxu0 0.0
    %206 = vmatpush.msra.mxu0 0.0
    %207 = vmatpush.msra.mxu0 0.0
    %208 = vmatpush.msra.mxu0 0.0
    %209 = vmatpush.msra.mxu0 %v192
    %210 = vmatmul.f32.gmra.mxu0 %v143
    %v211 = vpop.f32.mrf.mxu0
    %v212 = vadd.f32 %v64, %v211
    %213 = vmatmul.f32.gmra.mxu0 %v146
    %v214 = vpop.f32.mrf.mxu0
    %v215 = vadd.f32 %v69, %v214
    %216 = vmatmul.f32.gmra.mxu0 %v149
    %v217 = vpop.f32.mrf.mxu0
    %v218 = vadd.f32 %v74, %v217
    %219 = vmatmul.f32.gmra.mxu0 %v152
    %v220 = vpop.f32.mrf.mxu0
    %v221 = vadd.f32 %v79, %v220
    %222 = vmatmul.f32.gmra.mxu0 %v155
    %v223 = vpop.f32.mrf.mxu0
    %v224 = vadd.f32 %v84, %v223
    %225 = vmatmul.f32.gmra.mxu0 %v158
    %v226 = vpop.f32.mrf.mxu0
    %v227 = vadd.f32 %v89, %v226
    %228 = vmatmul.f32.gmra.mxu0 %v161
    %v229 = vpop.f32.mrf.mxu0
    %v230 = vadd.f32 %v94, %v229
    %231 = vmatmul.f32.gmra.mxu0 %v164
    %v232 = vpop.f32.mrf.mxu0
    %v233 = vadd.f32 %v99, %v232
    %234 = vmatmul.f32.gmra.mxu0 %v167
    %v235 = vpop.f32.mrf.mxu0
    %v236 = vadd.f32 %v104, %v235
    %237 = vmatmul.f32.gmra.mxu0 %v170
    %v238 = vpop.f32.mrf.mxu0
    %v239 = vadd.f32 %v109, %v238
    %240 = vmatmul.f32.gmra.mxu0 %v173
    %v241 = vpop.f32.mrf.mxu0
    %v242 = vadd.f32 %v114, %v241
    %243 = vmatmul.f32.gmra.mxu0 %v176
    %v244 = vpop.f32.mrf.mxu0
    %v245 = vadd.f32 %v119, %v244
    %246 = vmatmul.f32.gmra.mxu0 %v179
    %v247 = vpop.f32.mrf.mxu0
    %v248 = vadd.f32 %v124, %v247
    %249 = vmatmul.f32.gmra.mxu0 %v182
    %v250 = vpop.f32.mrf.mxu0
    %v251 = vadd.f32 %v129, %v250
    %252 = vmatmul.f32.gmra.mxu0 %v185
    %v253 = vpop.f32.mrf.mxu0
    %v254 = vadd.f32 %v134, %v253
    %255 = vmatmul.f32.gmra.mxu0 %v188
    %v256 = vpop.f32.mrf.mxu0
    %v257 = vadd.f32 %v139, %v256
    %258 = vdwg.mxu0
    %v259 = vmul.f32 %v212, 0.5
    %v260 = vmul.f32 %v215, 0.5
    %v261 = vmul.f32 %v218, 0.5
    %v262 = vmul.f32 %v221, 0.5
    %v263 = vmul.f32 %v224, 0.5
    %v264 = vmul.f32 %v227, 0.5
    %v265 = vmul.f32 %v230, 0.5
    %v266 = vmul.f32 %v233, 0.5
    %v267 = vmul.f32 %v236, 0.5
    %v268 = vmul.f32 %v239, 0.5
    %v269 = vmul.f32 %v242, 0.5
    %v270 = vmul.f32 %v245, 0.5
    %v271 = vmul.f32 %v248, 0.5
    %v272 = vmul.f32 %v251, 0.5
    %v273 = vmul.f32 %v254, 0.5
    %v274 = vmul.f32 %v257, 0.5
    %v275 = vmul.f32 %v212, 0.70710677
    %v276 = vmul.f32 %v215, 0.70710677
    %v277 = vmul.f32 %v218, 0.70710677
    %v278 = vmul.f32 %v221, 0.70710677
    %v279 = vmul.f32 %v224, 0.70710677
    %v280 = vmul.f32 %v227, 0.70710677
    %v281 = vmul.f32 %v230, 0.70710677
    %v282 = vmul.f32 %v233, 0.70710677
    %v283 = vmul.f32 %v236, 0.70710677
    %v284 = vmul.f32 %v239, 0.70710677
    %v285 = vmul.f32 %v242, 0.70710677
    %v286 = vmul.f32 %v245, 0.70710677
    %v287 = vmul.f32 %v248, 0.70710677
    %v288 = vmul.f32 %v251, 0.70710677
    %v289 = vmul.f32 %v254, 0.70710677
    %v290 = vmul.f32 %v257, 0.70710677
    %v291 = vmul.f32 %v275, %v275
    %v292 = vmin.f32 16.0, %v291
    %v293 = vmul.f32 %v292, 2.1237322e-06
    %v294 = vadd.f32 %v293, 0.00028619796
    %v295 = vmul.f32 %v292, %v294
    %v296 = vadd.f32 %v295, 0.0036580483
    %v297 = vmul.f32 %v292, %v296
    %v298 = vadd.f32 %v297, 0.05243302
    %v299 = vmul.f32 %v292, %v298
    %v300 = vadd.f32 %v299, 0.18741608
    %v301 = vmul.f32 %v292, %v300
    %v302 = vadd.f32 %v301, 1.1283791
    %v303 = vmul.f32 %v275, %v302
    %v304 = vmul.f32 %v292, 3.8918573e-05
    %v305 = vadd.f32 %v304, 0.001143296
    %v306 = vmul.f32 %v292, %v305
    %v307 = vadd.f32 %v306, 0.014752088
    %v308 = vmul.f32 %v292, %v307
    %v309 = vadd.f32 %v308, 0.112945676
    %v310 = vmul.f32 %v292, %v309
    %v311 = vadd.f32 %v310, 0.4994258
    %v312 = vmul.f32 %v292, %v311
    %v313 = vadd.f32 %v312, 1.0
    %v314 = vrcp.pop %v313
    %v315 = vmul.f32 %v313, %v314
    %v316 = vsub.f32 1.0, %v315
    %v317 = vmul.f32 %v314, %v316
    %v318 = vadd.f32 %v314, %v317
    %vm319 = vweird.f32 %v313
    %vm320 = vweird.f32 %v314
    %vm321 = vmor %vm319, %vm320
    %v322 = vsel %vm321, %v314, %v318
    %v323 = vand.u32 2147483647, %v313
    %vm324 = vcmp.eq.f32.partialorder %v323, 8.507059e+37
    %v325 = vand.u32 %v313, 2147483648
    %v326 = vor.u32 1.1754944e-38, %v325
    %v327 = vsel %vm324, %v326, %v322
    %v328 = vmul.f32 %v303, %v327
    %v329 = vmin.f32 %v328, 1.0
    %v330 = vmax.f32 %v329, -1.0
    %v331 = vmul.f32 %v276, %v276
    %v332 = vmin.f32 16.0, %v331
    %v333 = vmul.f32 %v332, 2.1237322e-06
    %v334 = vadd.f32 %v333, 0.00028619796
    %v335 = vmul.f32 %v332, %v334
    %v336 = vadd.f32 %v335, 0.0036580483
    %v337 = vmul.f32 %v332, %v336
    %v338 = vadd.f32 %v337, 0.05243302
    %v339 = vmul.f32 %v332, %v338
    %v340 = vadd.f32 %v339, 0.18741608
    %v341 = vmul.f32 %v332, %v340
    %v342 = vadd.f32 %v341, 1.1283791
    %v343 = vmul.f32 %v276, %v342
    %v344 = vmul.f32 %v332, 3.8918573e-05
    %v345 = vadd.f32 %v344, 0.001143296
    %v346 = vmul.f32 %v332, %v345
    %v347 = vadd.f32 %v346, 0.014752088
    %v348 = vmul.f32 %v332, %v347
    %v349 = vadd.f32 %v348, 0.112945676
    %v350 = vmul.f32 %v332, %v349
    %v351 = vadd.f32 %v350, 0.4994258
    %v352 = vmul.f32 %v332, %v351
    %v353 = vadd.f32 %v352, 1.0
    %v354 = vrcp.pop %v353
    %v355 = vmul.f32 %v353, %v354
    %v356 = vsub.f32 1.0, %v355
    %v357 = vmul.f32 %v354, %v356
    %v358 = vadd.f32 %v354, %v357
    %vm359 = vweird.f32 %v353
    %vm360 = vweird.f32 %v354
    %vm361 = vmor %vm359, %vm360
    %v362 = vsel %vm361, %v354, %v358
    %v363 = vand.u32 2147483647, %v353
    %vm364 = vcmp.eq.f32.partialorder %v363, 8.507059e+37
    %v365 = vand.u32 %v353, 2147483648
    %v366 = vor.u32 1.1754944e-38, %v365
    %v367 = vsel %vm364, %v366, %v362
    %v368 = vmul.f32 %v343, %v367
    %v369 = vmin.f32 %v368, 1.0
    %v370 = vmax.f32 %v369, -1.0
    %v371 = vmul.f32 %v277, %v277
    %v372 = vmin.f32 16.0, %v371
    %v373 = vmul.f32 %v372, 2.1237322e-06
    %v374 = vadd.f32 %v373, 0.00028619796
    %v375 = vmul.f32 %v372, %v374
    %v376 = vadd.f32 %v375, 0.0036580483
    %v377 = vmul.f32 %v372, %v376
    %v378 = vadd.f32 %v377, 0.05243302
    %v379 = vmul.f32 %v372, %v378
    %v380 = vadd.f32 %v379, 0.18741608
    %v381 = vmul.f32 %v372, %v380
    %v382 = vadd.f32 %v381, 1.1283791
    %v383 = vmul.f32 %v277, %v382
    %v384 = vmul.f32 %v372, 3.8918573e-05
    %v385 = vadd.f32 %v384, 0.001143296
    %v386 = vmul.f32 %v372, %v385
    %v387 = vadd.f32 %v386, 0.014752088
    %v388 = vmul.f32 %v372, %v387
    %v389 = vadd.f32 %v388, 0.112945676
    %v390 = vmul.f32 %v372, %v389
    %v391 = vadd.f32 %v390, 0.4994258
    %v392 = vmul.f32 %v372, %v391
    %v393 = vadd.f32 %v392, 1.0
    %v394 = vrcp.pop %v393
    %v395 = vmul.f32 %v393, %v394
    %v396 = vsub.f32 1.0, %v395
    %v397 = vmul.f32 %v394, %v396
    %v398 = vadd.f32 %v394, %v397
    %vm399 = vweird.f32 %v393
    %vm400 = vweird.f32 %v394
    %vm401 = vmor %vm399, %vm400
    %v402 = vsel %vm401, %v394, %v398
    %v403 = vand.u32 2147483647, %v393
    %vm404 = vcmp.eq.f32.partialorder %v403, 8.507059e+37
    %v405 = vand.u32 %v393, 2147483648
    %v406 = vor.u32 1.1754944e-38, %v405
    %v407 = vsel %vm404, %v406, %v402
    %v408 = vmul.f32 %v383, %v407
    %v409 = vmin.f32 %v408, 1.0
    %v410 = vmax.f32 %v409, -1.0
    %v411 = vmul.f32 %v278, %v278
    %v412 = vmin.f32 16.0, %v411
    %v413 = vmul.f32 %v412, 2.1237322e-06
    %v414 = vadd.f32 %v413, 0.00028619796
    %v415 = vmul.f32 %v412, %v414
    %v416 = vadd.f32 %v415, 0.0036580483
    %v417 = vmul.f32 %v412, %v416
    %v418 = vadd.f32 %v417, 0.05243302
    %v419 = vmul.f32 %v412, %v418
    %v420 = vadd.f32 %v419, 0.18741608
    %v421 = vmul.f32 %v412, %v420
    %v422 = vadd.f32 %v421, 1.1283791
    %v423 = vmul.f32 %v278, %v422
    %v424 = vmul.f32 %v412, 3.8918573e-05
    %v425 = vadd.f32 %v424, 0.001143296
    %v426 = vmul.f32 %v412, %v425
    %v427 = vadd.f32 %v426, 0.014752088
    %v428 = vmul.f32 %v412, %v427
    %v429 = vadd.f32 %v428, 0.112945676
    %v430 = vmul.f32 %v412, %v429
    %v431 = vadd.f32 %v430, 0.4994258
    %v432 = vmul.f32 %v412, %v431
    %v433 = vadd.f32 %v432, 1.0
    %v434 = vrcp.pop %v433
    %v435 = vmul.f32 %v433, %v434
    %v436 = vsub.f32 1.0, %v435
    %v437 = vmul.f32 %v434, %v436
    %v438 = vadd.f32 %v434, %v437
    %vm439 = vweird.f32 %v433
    %vm440 = vweird.f32 %v434
    %vm441 = vmor %vm439, %vm440
    %v442 = vsel %vm441, %v434, %v438
    %v443 = vand.u32 2147483647, %v433
    %vm444 = vcmp.eq.f32.partialorder %v443, 8.507059e+37
    %v445 = vand.u32 %v433, 2147483648
    %v446 = vor.u32 1.1754944e-38, %v445
    %v447 = vsel %vm444, %v446, %v442
    %v448 = vmul.f32 %v423, %v447
    %v449 = vmin.f32 %v448, 1.0
    %v450 = vmax.f32 %v449, -1.0
    %v451 = vmul.f32 %v279, %v279
    %v452 = vmin.f32 16.0, %v451
    %v453 = vmul.f32 %v452, 2.1237322e-06
    %v454 = vadd.f32 %v453, 0.00028619796
    %v455 = vmul.f32 %v452, %v454
    %v456 = vadd.f32 %v455, 0.0036580483
    %v457 = vmul.f32 %v452, %v456
    %v458 = vadd.f32 %v457, 0.05243302
    %v459 = vmul.f32 %v452, %v458
    %v460 = vadd.f32 %v459, 0.18741608
    %v461 = vmul.f32 %v452, %v460
    %v462 = vadd.f32 %v461, 1.1283791
    %v463 = vmul.f32 %v279, %v462
    %v464 = vmul.f32 %v452, 3.8918573e-05
    %v465 = vadd.f32 %v464, 0.001143296
    %v466 = vmul.f32 %v452, %v465
    %v467 = vadd.f32 %v466, 0.014752088
    %v468 = vmul.f32 %v452, %v467
    %v469 = vadd.f32 %v468, 0.112945676
    %v470 = vmul.f32 %v452, %v469
    %v471 = vadd.f32 %v470, 0.4994258
    %v472 = vmul.f32 %v452, %v471
    %v473 = vadd.f32 %v472, 1.0
    %v474 = vrcp.pop %v473
    %v475 = vmul.f32 %v473, %v474
    %v476 = vsub.f32 1.0, %v475
    %v477 = vmul.f32 %v474, %v476
    %v478 = vadd.f32 %v474, %v477
    %vm479 = vweird.f32 %v473
    %vm480 = vweird.f32 %v474
    %vm481 = vmor %vm479, %vm480
    %v482 = vsel %vm481, %v474, %v478
    %v483 = vand.u32 2147483647, %v473
    %vm484 = vcmp.eq.f32.partialorder %v483, 8.507059e+37
    %v485 = vand.u32 %v473, 2147483648
    %v486 = vor.u32 1.1754944e-38, %v485
    %v487 = vsel %vm484, %v486, %v482
    %v488 = vmul.f32 %v463, %v487
    %v489 = vmin.f32 %v488, 1.0
    %v490 = vmax.f32 %v489, -1.0
    %v491 = vmul.f32 %v280, %v280
    %v492 = vmin.f32 16.0, %v491
    %v493 = vmul.f32 %v492, 2.1237322e-06
    %v494 = vadd.f32 %v493, 0.00028619796
    %v495 = vmul.f32 %v492, %v494
    %v496 = vadd.f32 %v495, 0.0036580483
    %v497 = vmul.f32 %v492, %v496
    %v498 = vadd.f32 %v497, 0.05243302
    %v499 = vmul.f32 %v492, %v498
    %v500 = vadd.f32 %v499, 0.18741608
    %v501 = vmul.f32 %v492, %v500
    %v502 = vadd.f32 %v501, 1.1283791
    %v503 = vmul.f32 %v280, %v502
    %v504 = vmul.f32 %v492, 3.8918573e-05
    %v505 = vadd.f32 %v504, 0.001143296
    %v506 = vmul.f32 %v492, %v505
    %v507 = vadd.f32 %v506, 0.014752088
    %v508 = vmul.f32 %v492, %v507
    %v509 = vadd.f32 %v508, 0.112945676
    %v510 = vmul.f32 %v492, %v509
    %v511 = vadd.f32 %v510, 0.4994258
    %v512 = vmul.f32 %v492, %v511
    %v513 = vadd.f32 %v512, 1.0
    %v514 = vrcp.pop %v513
    %v515 = vmul.f32 %v513, %v514
    %v516 = vsub.f32 1.0, %v515
    %v517 = vmul.f32 %v514, %v516
    %v518 = vadd.f32 %v514, %v517
    %vm519 = vweird.f32 %v513
    %vm520 = vweird.f32 %v514
    %vm521 = vmor %vm519, %vm520
    %v522 = vsel %vm521, %v514, %v518
    %v523 = vand.u32 2147483647, %v513
    %vm524 = vcmp.eq.f32.partialorder %v523, 8.507059e+37
    %v525 = vand.u32 %v513, 2147483648
    %v526 = vor.u32 1.1754944e-38, %v525
    %v527 = vsel %vm524, %v526, %v522
    %v528 = vmul.f32 %v503, %v527
    %v529 = vmin.f32 %v528, 1.0
    %v530 = vmax.f32 %v529, -1.0
    %v531 = vmul.f32 %v281, %v281
    %v532 = vmin.f32 16.0, %v531
    %v533 = vmul.f32 %v532, 2.1237322e-06
    %v534 = vadd.f32 %v533, 0.00028619796
    %v535 = vmul.f32 %v532, %v534
    %v536 = vadd.f32 %v535, 0.0036580483
    %v537 = vmul.f32 %v532, %v536
    %v538 = vadd.f32 %v537, 0.05243302
    %v539 = vmul.f32 %v532, %v538
    %v540 = vadd.f32 %v539, 0.18741608
    %v541 = vmul.f32 %v532, %v540
    %v542 = vadd.f32 %v541, 1.1283791
    %v543 = vmul.f32 %v281, %v542
    %v544 = vmul.f32 %v532, 3.8918573e-05
    %v545 = vadd.f32 %v544, 0.001143296
    %v546 = vmul.f32 %v532, %v545
    %v547 = vadd.f32 %v546, 0.014752088
    %v548 = vmul.f32 %v532, %v547
    %v549 = vadd.f32 %v548, 0.112945676
    %v550 = vmul.f32 %v532, %v549
    %v551 = vadd.f32 %v550, 0.4994258
    %v552 = vmul.f32 %v532, %v551
    %v553 = vadd.f32 %v552, 1.0
    %v554 = vrcp.pop %v553
    %v555 = vmul.f32 %v553, %v554
    %v556 = vsub.f32 1.0, %v555
    %v557 = vmul.f32 %v554, %v556
    %v558 = vadd.f32 %v554, %v557
    %vm559 = vweird.f32 %v553
    %vm560 = vweird.f32 %v554
    %vm561 = vmor %vm559, %vm560
    %v562 = vsel %vm561, %v554, %v558
    %v563 = vand.u32 2147483647, %v553
    %vm564 = vcmp.eq.f32.partialorder %v563, 8.507059e+37
    %v565 = vand.u32 %v553, 2147483648
    %v566 = vor.u32 1.1754944e-38, %v565
    %v567 = vsel %vm564, %v566, %v562
    %v568 = vmul.f32 %v543, %v567
    %v569 = vmin.f32 %v568, 1.0
    %v570 = vmax.f32 %v569, -1.0
    %v571 = vmul.f32 %v282, %v282
    %v572 = vmin.f32 16.0, %v571
    %v573 = vmul.f32 %v572, 2.1237322e-06
    %v574 = vadd.f32 %v573, 0.00028619796
    %v575 = vmul.f32 %v572, %v574
    %v576 = vadd.f32 %v575, 0.0036580483
    %v577 = vmul.f32 %v572, %v576
    %v578 = vadd.f32 %v577, 0.05243302
    %v579 = vmul.f32 %v572, %v578
    %v580 = vadd.f32 %v579, 0.18741608
    %v581 = vmul.f32 %v572, %v580
    %v582 = vadd.f32 %v581, 1.1283791
    %v583 = vmul.f32 %v282, %v582
    %v584 = vmul.f32 %v572, 3.8918573e-05
    %v585 = vadd.f32 %v584, 0.001143296
    %v586 = vmul.f32 %v572, %v585
    %v587 = vadd.f32 %v586, 0.014752088
    %v588 = vmul.f32 %v572, %v587
    %v589 = vadd.f32 %v588, 0.112945676
    %v590 = vmul.f32 %v572, %v589
    %v591 = vadd.f32 %v590, 0.4994258
    %v592 = vmul.f32 %v572, %v591
    %v593 = vadd.f32 %v592, 1.0
    %v594 = vrcp.pop %v593
    %v595 = vmul.f32 %v593, %v594
    %v596 = vsub.f32 1.0, %v595
    %v597 = vmul.f32 %v594, %v596
    %v598 = vadd.f32 %v594, %v597
    %vm599 = vweird.f32 %v593
    %vm600 = vweird.f32 %v594
    %vm601 = vmor %vm599, %vm600
    %v602 = vsel %vm601, %v594, %v598
    %v603 = vand.u32 2147483647, %v593
    %vm604 = vcmp.eq.f32.partialorder %v603, 8.507059e+37
    %v605 = vand.u32 %v593, 2147483648
    %v606 = vor.u32 1.1754944e-38, %v605
    %v607 = vsel %vm604, %v606, %v602
    %v608 = vmul.f32 %v583, %v607
    %v609 = vmin.f32 %v608, 1.0
    %v610 = vmax.f32 %v609, -1.0
    %v611 = vmul.f32 %v283, %v283
    %v612 = vmin.f32 16.0, %v611
    %v613 = vmul.f32 %v612, 2.1237322e-06
    %v614 = vadd.f32 %v613, 0.00028619796
    %v615 = vmul.f32 %v612, %v614
    %v616 = vadd.f32 %v615, 0.0036580483
    %v617 = vmul.f32 %v612, %v616
    %v618 = vadd.f32 %v617, 0.05243302
    %v619 = vmul.f32 %v612, %v618
    %v620 = vadd.f32 %v619, 0.18741608
    %v621 = vmul.f32 %v612, %v620
    %v622 = vadd.f32 %v621, 1.1283791
    %v623 = vmul.f32 %v283, %v622
    %v624 = vmul.f32 %v612, 3.8918573e-05
    %v625 = vadd.f32 %v624, 0.001143296
    %v626 = vmul.f32 %v612, %v625
    %v627 = vadd.f32 %v626, 0.014752088
    %v628 = vmul.f32 %v612, %v627
    %v629 = vadd.f32 %v628, 0.112945676
    %v630 = vmul.f32 %v612, %v629
    %v631 = vadd.f32 %v630, 0.4994258
    %v632 = vmul.f32 %v612, %v631
    %v633 = vadd.f32 %v632, 1.0
    %v634 = vrcp.pop %v633
    %v635 = vmul.f32 %v633, %v634
    %v636 = vsub.f32 1.0, %v635
    %v637 = vmul.f32 %v634, %v636
    %v638 = vadd.f32 %v634, %v637
    %vm639 = vweird.f32 %v633
    %vm640 = vweird.f32 %v634
    %vm641 = vmor %vm639, %vm640
    %v642 = vsel %vm641, %v634, %v638
    %v643 = vand.u32 2147483647, %v633
    %vm644 = vcmp.eq.f32.partialorder %v643, 8.507059e+37
    %v645 = vand.u32 %v633, 2147483648
    %v646 = vor.u32 1.1754944e-38, %v645
    %v647 = vsel %vm644, %v646, %v642
    %v648 = vmul.f32 %v623, %v647
    %v649 = vmin.f32 %v648, 1.0
    %v650 = vmax.f32 %v649, -1.0
    %v651 = vmul.f32 %v284, %v284
    %v652 = vmin.f32 16.0, %v651
    %v653 = vmul.f32 %v652, 2.1237322e-06
    %v654 = vadd.f32 %v653, 0.00028619796
    %v655 = vmul.f32 %v652, %v654
    %v656 = vadd.f32 %v655, 0.0036580483
    %v657 = vmul.f32 %v652, %v656
    %v658 = vadd.f32 %v657, 0.05243302
    %v659 = vmul.f32 %v652, %v658
    %v660 = vadd.f32 %v659, 0.18741608
    %v661 = vmul.f32 %v652, %v660
    %v662 = vadd.f32 %v661, 1.1283791
    %v663 = vmul.f32 %v284, %v662
    %v664 = vmul.f32 %v652, 3.8918573e-05
    %v665 = vadd.f32 %v664, 0.001143296
    %v666 = vmul.f32 %v652, %v665
    %v667 = vadd.f32 %v666, 0.014752088
    %v668 = vmul.f32 %v652, %v667
    %v669 = vadd.f32 %v668, 0.112945676
    %v670 = vmul.f32 %v652, %v669
    %v671 = vadd.f32 %v670, 0.4994258
    %v672 = vmul.f32 %v652, %v671
    %v673 = vadd.f32 %v672, 1.0
    %v674 = vrcp.pop %v673
    %v675 = vmul.f32 %v673, %v674
    %v676 = vsub.f32 1.0, %v675
    %v677 = vmul.f32 %v674, %v676
    %v678 = vadd.f32 %v674, %v677
    %vm679 = vweird.f32 %v673
    %vm680 = vweird.f32 %v674
    %vm681 = vmor %vm679, %vm680
    %v682 = vsel %vm681, %v674, %v678
    %v683 = vand.u32 2147483647, %v673
    %vm684 = vcmp.eq.f32.partialorder %v683, 8.507059e+37
    %v685 = vand.u32 %v673, 2147483648
    %v686 = vor.u32 1.1754944e-38, %v685
    %v687 = vsel %vm684, %v686, %v682
    %v688 = vmul.f32 %v663, %v687
    %v689 = vmin.f32 %v688, 1.0
    %v690 = vmax.f32 %v689, -1.0
    %v691 = vmul.f32 %v285, %v285
    %v692 = vmin.f32 16.0, %v691
    %v693 = vmul.f32 %v692, 2.1237322e-06
    %v694 = vadd.f32 %v693, 0.00028619796
    %v695 = vmul.f32 %v692, %v694
    %v696 = vadd.f32 %v695, 0.0036580483
    %v697 = vmul.f32 %v692, %v696
    %v698 = vadd.f32 %v697, 0.05243302
    %v699 = vmul.f32 %v692, %v698
    %v700 = vadd.f32 %v699, 0.18741608
    %v701 = vmul.f32 %v692, %v700
    %v702 = vadd.f32 %v701, 1.1283791
    %v703 = vmul.f32 %v285, %v702
    %v704 = vmul.f32 %v692, 3.8918573e-05
    %v705 = vadd.f32 %v704, 0.001143296
    %v706 = vmul.f32 %v692, %v705
    %v707 = vadd.f32 %v706, 0.014752088
    %v708 = vmul.f32 %v692, %v707
    %v709 = vadd.f32 %v708, 0.112945676
    %v710 = vmul.f32 %v692, %v709
    %v711 = vadd.f32 %v710, 0.4994258
    %v712 = vmul.f32 %v692, %v711
    %v713 = vadd.f32 %v712, 1.0
    %v714 = vrcp.pop %v713
    %v715 = vmul.f32 %v713, %v714
    %v716 = vsub.f32 1.0, %v715
    %v717 = vmul.f32 %v714, %v716
    %v718 = vadd.f32 %v714, %v717
    %vm719 = vweird.f32 %v713
    %vm720 = vweird.f32 %v714
    %vm721 = vmor %vm719, %vm720
    %v722 = vsel %vm721, %v714, %v718
    %v723 = vand.u32 2147483647, %v713
    %vm724 = vcmp.eq.f32.partialorder %v723, 8.507059e+37
    %v725 = vand.u32 %v713, 2147483648
    %v726 = vor.u32 1.1754944e-38, %v725
    %v727 = vsel %vm724, %v726, %v722
    %v728 = vmul.f32 %v703, %v727
    %v729 = vmin.f32 %v728, 1.0
    %v730 = vmax.f32 %v729, -1.0
    %v731 = vmul.f32 %v286, %v286
    %v732 = vmin.f32 16.0, %v731
    %v733 = vmul.f32 %v732, 2.1237322e-06
    %v734 = vadd.f32 %v733, 0.00028619796
    %v735 = vmul.f32 %v732, %v734
    %v736 = vadd.f32 %v735, 0.0036580483
    %v737 = vmul.f32 %v732, %v736
    %v738 = vadd.f32 %v737, 0.05243302
    %v739 = vmul.f32 %v732, %v738
    %v740 = vadd.f32 %v739, 0.18741608
    %v741 = vmul.f32 %v732, %v740
    %v742 = vadd.f32 %v741, 1.1283791
    %v743 = vmul.f32 %v286, %v742
    %v744 = vmul.f32 %v732, 3.8918573e-05
    %v745 = vadd.f32 %v744, 0.001143296
    %v746 = vmul.f32 %v732, %v745
    %v747 = vadd.f32 %v746, 0.014752088
    %v748 = vmul.f32 %v732, %v747
    %v749 = vadd.f32 %v748, 0.112945676
    %v750 = vmul.f32 %v732, %v749
    %v751 = vadd.f32 %v750, 0.4994258
    %v752 = vmul.f32 %v732, %v751
    %v753 = vadd.f32 %v752, 1.0
    %v754 = vrcp.pop %v753
    %v755 = vmul.f32 %v753, %v754
    %v756 = vsub.f32 1.0, %v755
    %v757 = vmul.f32 %v754, %v756
    %v758 = vadd.f32 %v754, %v757
    %vm759 = vweird.f32 %v753
    %vm760 = vweird.f32 %v754
    %vm761 = vmor %vm759, %vm760
    %v762 = vsel %vm761, %v754, %v758
    %v763 = vand.u32 2147483647, %v753
    %vm764 = vcmp.eq.f32.partialorder %v763, 8.507059e+37
    %v765 = vand.u32 %v753, 2147483648
    %v766 = vor.u32 1.1754944e-38, %v765
    %v767 = vsel %vm764, %v766, %v762
    %v768 = vmul.f32 %v743, %v767
    %v769 = vmin.f32 %v768, 1.0
    %v770 = vmax.f32 %v769, -1.0
    %v771 = vmul.f32 %v287, %v287
    %v772 = vmin.f32 16.0, %v771
    %v773 = vmul.f32 %v772, 2.1237322e-06
    %v774 = vadd.f32 %v773, 0.00028619796
    %v775 = vmul.f32 %v772, %v774
    %v776 = vadd.f32 %v775, 0.0036580483
    %v777 = vmul.f32 %v772, %v776
    %v778 = vadd.f32 %v777, 0.05243302
    %v779 = vmul.f32 %v772, %v778
    %v780 = vadd.f32 %v779, 0.18741608
    %v781 = vmul.f32 %v772, %v780
    %v782 = vadd.f32 %v781, 1.1283791
    %v783 = vmul.f32 %v287, %v782
    %v784 = vmul.f32 %v772, 3.8918573e-05
    %v785 = vadd.f32 %v784, 0.001143296
    %v786 = vmul.f32 %v772, %v785
    %v787 = vadd.f32 %v786, 0.014752088
    %v788 = vmul.f32 %v772, %v787
    %v789 = vadd.f32 %v788, 0.112945676
    %v790 = vmul.f32 %v772, %v789
    %v791 = vadd.f32 %v790, 0.4994258
    %v792 = vmul.f32 %v772, %v791
    %v793 = vadd.f32 %v792, 1.0
    %v794 = vrcp.pop %v793
    %v795 = vmul.f32 %v793, %v794
    %v796 = vsub.f32 1.0, %v795
    %v797 = vmul.f32 %v794, %v796
    %v798 = vadd.f32 %v794, %v797
    %vm799 = vweird.f32 %v793
    %vm800 = vweird.f32 %v794
    %vm801 = vmor %vm799, %vm800
    %v802 = vsel %vm801, %v794, %v798
    %v803 = vand.u32 2147483647, %v793
    %vm804 = vcmp.eq.f32.partialorder %v803, 8.507059e+37
    %v805 = vand.u32 %v793, 2147483648
    %v806 = vor.u32 1.1754944e-38, %v805
    %v807 = vsel %vm804, %v806, %v802
    %v808 = vmul.f32 %v783, %v807
    %v809 = vmin.f32 %v808, 1.0
    %v810 = vmax.f32 %v809, -1.0
    %v811 = vmul.f32 %v288, %v288
    %v812 = vmin.f32 16.0, %v811
    %v813 = vmul.f32 %v812, 2.1237322e-06
    %v814 = vadd.f32 %v813, 0.00028619796
    %v815 = vmul.f32 %v812, %v814
    %v816 = vadd.f32 %v815, 0.0036580483
    %v817 = vmul.f32 %v812, %v816
    %v818 = vadd.f32 %v817, 0.05243302
    %v819 = vmul.f32 %v812, %v818
    %v820 = vadd.f32 %v819, 0.18741608
    %v821 = vmul.f32 %v812, %v820
    %v822 = vadd.f32 %v821, 1.1283791
    %v823 = vmul.f32 %v288, %v822
    %v824 = vmul.f32 %v812, 3.8918573e-05
    %v825 = vadd.f32 %v824, 0.001143296
    %v826 = vmul.f32 %v812, %v825
    %v827 = vadd.f32 %v826, 0.014752088
    %v828 = vmul.f32 %v812, %v827
    %v829 = vadd.f32 %v828, 0.112945676
    %v830 = vmul.f32 %v812, %v829
    %v831 = vadd.f32 %v830, 0.4994258
    %v832 = vmul.f32 %v812, %v831
    %v833 = vadd.f32 %v832, 1.0
    %v834 = vrcp.pop %v833
    %v835 = vmul.f32 %v833, %v834
    %v836 = vsub.f32 1.0, %v835
    %v837 = vmul.f32 %v834, %v836
    %v838 = vadd.f32 %v834, %v837
    %vm839 = vweird.f32 %v833
    %vm840 = vweird.f32 %v834
    %vm841 = vmor %vm839, %vm840
    %v842 = vsel %vm841, %v834, %v838
    %v843 = vand.u32 2147483647, %v833
    %vm844 = vcmp.eq.f32.partialorder %v843, 8.507059e+37
    %v845 = vand.u32 %v833, 2147483648
    %v846 = vor.u32 1.1754944e-38, %v845
    %v847 = vsel %vm844, %v846, %v842
    %v848 = vmul.f32 %v823, %v847
    %v849 = vmin.f32 %v848, 1.0
    %v850 = vmax.f32 %v849, -1.0
    %v851 = vmul.f32 %v289, %v289
    %v852 = vmin.f32 16.0, %v851
    %v853 = vmul.f32 %v852, 2.1237322e-06
    %v854 = vadd.f32 %v853, 0.00028619796
    %v855 = vmul.f32 %v852, %v854
    %v856 = vadd.f32 %v855, 0.0036580483
    %v857 = vmul.f32 %v852, %v856
    %v858 = vadd.f32 %v857, 0.05243302
    %v859 = vmul.f32 %v852, %v858
    %v860 = vadd.f32 %v859, 0.18741608
    %v861 = vmul.f32 %v852, %v860
    %v862 = vadd.f32 %v861, 1.1283791
    %v863 = vmul.f32 %v289, %v862
    %v864 = vmul.f32 %v852, 3.8918573e-05
    %v865 = vadd.f32 %v864, 0.001143296
    %v866 = vmul.f32 %v852, %v865
    %v867 = vadd.f32 %v866, 0.014752088
    %v868 = vmul.f32 %v852, %v867
    %v869 = vadd.f32 %v868, 0.112945676
    %v870 = vmul.f32 %v852, %v869
    %v871 = vadd.f32 %v870, 0.4994258
    %v872 = vmul.f32 %v852, %v871
    %v873 = vadd.f32 %v872, 1.0
    %v874 = vrcp.pop %v873
    %v875 = vmul.f32 %v873, %v874
    %v876 = vsub.f32 1.0, %v875
    %v877 = vmul.f32 %v874, %v876
    %v878 = vadd.f32 %v874, %v877
    %vm879 = vweird.f32 %v873
    %vm880 = vweird.f32 %v874
    %vm881 = vmor %vm879, %vm880
    %v882 = vsel %vm881, %v874, %v878
    %v883 = vand.u32 2147483647, %v873
    %vm884 = vcmp.eq.f32.partialorder %v883, 8.507059e+37
    %v885 = vand.u32 %v873, 2147483648
    %v886 = vor.u32 1.1754944e-38, %v885
    %v887 = vsel %vm884, %v886, %v882
    %v888 = vmul.f32 %v863, %v887
    %v889 = vmin.f32 %v888, 1.0
    %v890 = vmax.f32 %v889, -1.0
    %v891 = vmul.f32 %v290, %v290
    %v892 = vmin.f32 16.0, %v891
    %v893 = vmul.f32 %v892, 2.1237322e-06
    %v894 = vadd.f32 %v893, 0.00028619796
    %v895 = vmul.f32 %v892, %v894
    %v896 = vadd.f32 %v895, 0.0036580483
    %v897 = vmul.f32 %v892, %v896
    %v898 = vadd.f32 %v897, 0.05243302
    %v899 = vmul.f32 %v892, %v898
    %v900 = vadd.f32 %v899, 0.18741608
    %v901 = vmul.f32 %v892, %v900
    %v902 = vadd.f32 %v901, 1.1283791
    %v903 = vmul.f32 %v290, %v902
    %v904 = vmul.f32 %v892, 3.8918573e-05
    %v905 = vadd.f32 %v904, 0.001143296
    %v906 = vmul.f32 %v892, %v905
    %v907 = vadd.f32 %v906, 0.014752088
    %v908 = vmul.f32 %v892, %v907
    %v909 = vadd.f32 %v908, 0.112945676
    %v910 = vmul.f32 %v892, %v909
    %v911 = vadd.f32 %v910, 0.4994258
    %v912 = vmul.f32 %v892, %v911
    %v913 = vadd.f32 %v912, 1.0
    %v914 = vrcp.pop %v913
    %v915 = vmul.f32 %v913, %v914
    %v916 = vsub.f32 1.0, %v915
    %v917 = vmul.f32 %v914, %v916
    %v918 = vadd.f32 %v914, %v917
    %vm919 = vweird.f32 %v913
    %vm920 = vweird.f32 %v914
    %vm921 = vmor %vm919, %vm920
    %v922 = vsel %vm921, %v914, %v918
    %v923 = vand.u32 2147483647, %v913
    %vm924 = vcmp.eq.f32.partialorder %v923, 8.507059e+37
    %v925 = vand.u32 %v913, 2147483648
    %v926 = vor.u32 1.1754944e-38, %v925
    %v927 = vsel %vm924, %v926, %v922
    %v928 = vmul.f32 %v903, %v927
    %v929 = vmin.f32 %v928, 1.0
    %v930 = vmax.f32 %v929, -1.0
    %v931 = vadd.f32 %v330, 1.0
    %v932 = vadd.f32 %v370, 1.0
    %v933 = vadd.f32 %v410, 1.0
    %v934 = vadd.f32 %v450, 1.0
    %v935 = vadd.f32 %v490, 1.0
    %v936 = vadd.f32 %v530, 1.0
    %v937 = vadd.f32 %v570, 1.0
    %v938 = vadd.f32 %v610, 1.0
    %v939 = vadd.f32 %v650, 1.0
    %v940 = vadd.f32 %v690, 1.0
    %v941 = vadd.f32 %v730, 1.0
    %v942 = vadd.f32 %v770, 1.0
    %v943 = vadd.f32 %v810, 1.0
    %v944 = vadd.f32 %v850, 1.0
    %v945 = vadd.f32 %v890, 1.0
    %v946 = vadd.f32 %v930, 1.0
    %v947 = vmul.f32 %v259, %v931
    %v948 = vmul.f32 %v260, %v932
    %v949 = vmul.f32 %v261, %v933
    %v950 = vmul.f32 %v262, %v934
    %v951 = vmul.f32 %v263, %v935
    %v952 = vmul.f32 %v264, %v936
    %v953 = vmul.f32 %v265, %v937
    %v954 = vmul.f32 %v266, %v938
    %v955 = vmul.f32 %v267, %v939
    %v956 = vmul.f32 %v268, %v940
    %v957 = vmul.f32 %v269, %v941
    %v958 = vmul.f32 %v270, %v942
    %v959 = vmul.f32 %v271, %v943
    %v960 = vmul.f32 %v272, %v944
    %v961 = vmul.f32 %v273, %v945
    %v962 = vmul.f32 %v274, %v946
    %v963 = vld [vmem:[%s3] sm:$0xff]
    %v964 = vld [vmem:[%s3 + $0x8] sm:$0xff]
    %v965 = vld [vmem:[%s3 + $0x10] sm:$0xff]
    %v966 = vld [vmem:[%s3 + $0x18] sm:$0xff]
    %v967 = vld [vmem:[%s3 + $0x20] sm:$0xff]
    %v968 = vld [vmem:[%s3 + $0x28] sm:$0xff]
    %v969 = vld [vmem:[%s3 + $0x30] sm:$0xff]
    %v970 = vld [vmem:[%s3 + $0x38] sm:$0xff]
    %v971 = vld [vmem:[%s3 + $0x40] sm:$0xff]
    %v972 = vld [vmem:[%s3 + $0x48] sm:$0xff]
    %v973 = vld [vmem:[%s3 + $0x50] sm:$0xff]
    %v974 = vld [vmem:[%s3 + $0x58] sm:$0xff]
    %v975 = vld [vmem:[%s3 + $0x60] sm:$0xff]
    %v976 = vld [vmem:[%s3 + $0x68] sm:$0xff]
    %v977 = vld [vmem:[%s3 + $0x70] sm:$0xff]
    %v978 = vld [vmem:[%s3 + $0x78] sm:$0xff]
    %v979 = vld [vmem:[%s4] sm:$0xff]
    %v980 = vld [vmem:[%s4 + $0x8] sm:$0xff]
    %v981 = vld [vmem:[%s4 + $0x10] sm:$0xff]
    %v982 = vld [vmem:[%s4 + $0x18] sm:$0xff]
    %v983 = vld [vmem:[%s4 + $0x20] sm:$0xff]
    %v984 = vld [vmem:[%s4 + $0x28] sm:$0xff]
    %v985 = vld [vmem:[%s4 + $0x30] sm:$0xff]
    %v986 = vld [vmem:[%s4 + $0x38] sm:$0xff]
    %v987 = vld [vmem:[%s4 + $0x40] sm:$0xff]
    %v988 = vld [vmem:[%s4 + $0x48] sm:$0xff]
    %v989 = vld [vmem:[%s4 + $0x50] sm:$0xff]
    %v990 = vld [vmem:[%s4 + $0x58] sm:$0xff]
    %v991 = vld [vmem:[%s4 + $0x60] sm:$0xff]
    %v992 = vld [vmem:[%s4 + $0x68] sm:$0xff]
    %v993 = vld [vmem:[%s4 + $0x70] sm:$0xff]
    %v994 = vld [vmem:[%s4 + $0x78] sm:$0xff]
    %996 = vset.pattern.permute.xlu0 0
    %997 = vperm.xlu0 %996, %v979
    %v998 = vpop.permute.xlu0 %997
    %1001 = vset.pattern.permute.xlu0 0
    %1002 = vperm.xlu0 %1001, %v980
    %v1003 = vpop.permute.xlu0 %1002
    %1006 = vset.pattern.permute.xlu0 0
    %1007 = vperm.xlu0 %1006, %v981
    %v1008 = vpop.permute.xlu0 %1007
    %1011 = vset.pattern.permute.xlu0 0
    %1012 = vperm.xlu0 %1011, %v982
    %v1013 = vpop.permute.xlu0 %1012
    %1016 = vset.pattern.permute.xlu0 0
    %1017 = vperm.xlu0 %1016, %v983
    %v1018 = vpop.permute.xlu0 %1017
    %1021 = vset.pattern.permute.xlu0 0
    %1022 = vperm.xlu0 %1021, %v984
    %v1023 = vpop.permute.xlu0 %1022
    %1026 = vset.pattern.permute.xlu0 0
    %1027 = vperm.xlu0 %1026, %v985
    %v1028 = vpop.permute.xlu0 %1027
    %1031 = vset.pattern.permute.xlu0 0
    %1032 = vperm.xlu0 %1031, %v986
    %v1033 = vpop.permute.xlu0 %1032
    %1036 = vset.pattern.permute.xlu0 0
    %1037 = vperm.xlu0 %1036, %v987
    %v1038 = vpop.permute.xlu0 %1037
    %1041 = vset.pattern.permute.xlu0 0
    %1042 = vperm.xlu0 %1041, %v988
    %v1043 = vpop.permute.xlu0 %1042
    %1046 = vset.pattern.permute.xlu0 0
    %1047 = vperm.xlu0 %1046, %v989
    %v1048 = vpop.permute.xlu0 %1047
    %1051 = vset.pattern.permute.xlu0 0
    %1052 = vperm.xlu0 %1051, %v990
    %v1053 = vpop.permute.xlu0 %1052
    %1056 = vset.pattern.permute.xlu0 0
    %1057 = vperm.xlu0 %1056, %v991
    %v1058 = vpop.permute.xlu0 %1057
    %1061 = vset.pattern.permute.xlu0 0
    %1062 = vperm.xlu0 %1061, %v992
    %v1063 = vpop.permute.xlu0 %1062
    %1066 = vset.pattern.permute.xlu0 0
    %1067 = vperm.xlu0 %1066, %v993
    %v1068 = vpop.permute.xlu0 %1067
    %1071 = vset.pattern.permute.xlu0 0
    %1072 = vperm.xlu0 %1071, %v994
    %v1073 = vpop.permute.xlu0 %1072
    %1075 = vmatpush.msra.mxu0 %v962
    %1076 = vmatpush.msra.mxu0 %v961
    %1077 = vmatpush.msra.mxu0 %v960
    %1078 = vmatpush.msra.mxu0 %v959
    %1079 = vmatpush.msra.mxu0 %v958
    %1080 = vmatpush.msra.mxu0 %v957
    %1081 = vmatpush.msra.mxu0 %v956
    %1082 = vmatpush.msra.mxu0 %v955
    %1083 = vmatpush.msra.mxu0 %v954
    %1084 = vmatpush.msra.mxu0 %v953
    %1085 = vmatpush.msra.mxu0 %v952
    %1086 = vmatpush.msra.mxu0 %v951
    %1087 = vmatpush.msra.mxu0 %v950
    %1088 = vmatpush.msra.mxu0 %v949
    %1089 = vmatpush.msra.mxu0 %v948
    %1090 = vmatpush.msra.mxu0 %v947
    %1091 = vmatmul.f32.gmra.mxu0 %v963
    %v1092 = vpop.f32.mrf.mxu0
    %v1093 = vadd.f32 %v998, %v1092
    %1094 = vmatmul.f32.gmra.mxu0 %v964
    %v1095 = vpop.f32.mrf.mxu0
    %v1096 = vadd.f32 %v1003, %v1095
    %1097 = vmatmul.f32.gmra.mxu0 %v965
    %v1098 = vpop.f32.mrf.mxu0
    %v1099 = vadd.f32 %v1008, %v1098
    %1100 = vmatmul.f32.gmra.mxu0 %v966
    %v1101 = vpop.f32.mrf.mxu0
    %v1102 = vadd.f32 %v1013, %v1101
    %1103 = vmatmul.f32.gmra.mxu0 %v967
    %v1104 = vpop.f32.mrf.mxu0
    %v1105 = vadd.f32 %v1018, %v1104
    %1106 = vmatmul.f32.gmra.mxu0 %v968
    %v1107 = vpop.f32.mrf.mxu0
    %v1108 = vadd.f32 %v1023, %v1107
    %1109 = vmatmul.f32.gmra.mxu0 %v969
    %v1110 = vpop.f32.mrf.mxu0
    %v1111 = vadd.f32 %v1028, %v1110
    %1112 = vmatmul.f32.gmra.mxu0 %v970
    %v1113 = vpop.f32.mrf.mxu0
    %v1114 = vadd.f32 %v1033, %v1113
    %1115 = vmatmul.f32.gmra.mxu0 %v971
    %v1116 = vpop.f32.mrf.mxu0
    %v1117 = vadd.f32 %v1038, %v1116
    %1118 = vmatmul.f32.gmra.mxu0 %v972
    %v1119 = vpop.f32.mrf.mxu0
    %v1120 = vadd.f32 %v1043, %v1119
    %1121 = vmatmul.f32.gmra.mxu0 %v973
    %v1122 = vpop.f32.mrf.mxu0
    %v1123 = vadd.f32 %v1048, %v1122
    %1124 = vmatmul.f32.gmra.mxu0 %v974
    %v1125 = vpop.f32.mrf.mxu0
    %v1126 = vadd.f32 %v1053, %v1125
    %1127 = vmatmul.f32.gmra.mxu0 %v975
    %v1128 = vpop.f32.mrf.mxu0
    %v1129 = vadd.f32 %v1058, %v1128
    %1130 = vmatmul.f32.gmra.mxu0 %v976
    %v1131 = vpop.f32.mrf.mxu0
    %v1132 = vadd.f32 %v1063, %v1131
    %1133 = vmatmul.f32.gmra.mxu0 %v977
    %v1134 = vpop.f32.mrf.mxu0
    %v1135 = vadd.f32 %v1068, %v1134
    %1136 = vmatmul.f32.gmra.mxu0 %v978
    %v1137 = vpop.f32.mrf.mxu0
    %v1138 = vadd.f32 %v1073, %v1137
    %1139 = vdwg.mxu0
    %v1140 = vmul.f32 %v1093, 0.5
    %v1141 = vmul.f32 %v1096, 0.5
    %v1142 = vmul.f32 %v1099, 0.5
    %v1143 = vmul.f32 %v1102, 0.5
    %v1144 = vmul.f32 %v1105, 0.5
    %v1145 = vmul.f32 %v1108, 0.5
    %v1146 = vmul.f32 %v1111, 0.5
    %v1147 = vmul.f32 %v1114, 0.5
    %v1148 = vmul.f32 %v1117, 0.5
    %v1149 = vmul.f32 %v1120, 0.5
    %v1150 = vmul.f32 %v1123, 0.5
    %v1151 = vmul.f32 %v1126, 0.5
    %v1152 = vmul.f32 %v1129, 0.5
    %v1153 = vmul.f32 %v1132, 0.5
    %v1154 = vmul.f32 %v1135, 0.5
    %v1155 = vmul.f32 %v1138, 0.5
    %v1156 = vmul.f32 %v1093, 0.70710677
    %v1157 = vmul.f32 %v1096, 0.70710677
    %v1158 = vmul.f32 %v1099, 0.70710677
    %v1159 = vmul.f32 %v1102, 0.70710677
    %v1160 = vmul.f32 %v1105, 0.70710677
    %v1161 = vmul.f32 %v1108, 0.70710677
    %v1162 = vmul.f32 %v1111, 0.70710677
    %v1163 = vmul.f32 %v1114, 0.70710677
    %v1164 = vmul.f32 %v1117, 0.70710677
    %v1165 = vmul.f32 %v1120, 0.70710677
    %v1166 = vmul.f32 %v1123, 0.70710677
    %v1167 = vmul.f32 %v1126, 0.70710677
    %v1168 = vmul.f32 %v1129, 0.70710677
    %v1169 = vmul.f32 %v1132, 0.70710677
    %v1170 = vmul.f32 %v1135, 0.70710677
    %v1171 = vmul.f32 %v1138, 0.70710677
    %v1172 = vmul.f32 %v1156, %v1156
    %v1173 = vmin.f32 16.0, %v1172
    %v1174 = vmul.f32 %v1173, 2.1237322e-06
    %v1175 = vadd.f32 %v1174, 0.00028619796
    %v1176 = vmul.f32 %v1173, %v1175
    %v1177 = vadd.f32 %v1176, 0.0036580483
    %v1178 = vmul.f32 %v1173, %v1177
    %v1179 = vadd.f32 %v1178, 0.05243302
    %v1180 = vmul.f32 %v1173, %v1179
    %v1181 = vadd.f32 %v1180, 0.18741608
    %v1182 = vmul.f32 %v1173, %v1181
    %v1183 = vadd.f32 %v1182, 1.1283791
    %v1184 = vmul.f32 %v1156, %v1183
    %v1185 = vmul.f32 %v1173, 3.8918573e-05
    %v1186 = vadd.f32 %v1185, 0.001143296
    %v1187 = vmul.f32 %v1173, %v1186
    %v1188 = vadd.f32 %v1187, 0.014752088
    %v1189 = vmul.f32 %v1173, %v1188
    %v1190 = vadd.f32 %v1189, 0.112945676
    %v1191 = vmul.f32 %v1173, %v1190
    %v1192 = vadd.f32 %v1191, 0.4994258
    %v1193 = vmul.f32 %v1173, %v1192
    %v1194 = vadd.f32 %v1193, 1.0
    %v1195 = vrcp.pop %v1194
    %v1196 = vmul.f32 %v1194, %v1195
    %v1197 = vsub.f32 1.0, %v1196
    %v1198 = vmul.f32 %v1195, %v1197
    %v1199 = vadd.f32 %v1195, %v1198
    %vm1200 = vweird.f32 %v1194
    %vm1201 = vweird.f32 %v1195
    %vm1202 = vmor %vm1200, %vm1201
    %v1203 = vsel %vm1202, %v1195, %v1199
    %v1204 = vand.u32 2147483647, %v1194
    %vm1205 = vcmp.eq.f32.partialorder %v1204, 8.507059e+37
    %v1206 = vand.u32 %v1194, 2147483648
    %v1207 = vor.u32 1.1754944e-38, %v1206
    %v1208 = vsel %vm1205, %v1207, %v1203
    %v1209 = vmul.f32 %v1184, %v1208
    %v1210 = vmin.f32 %v1209, 1.0
    %v1211 = vmax.f32 %v1210, -1.0
    %v1212 = vmul.f32 %v1157, %v1157
    %v1213 = vmin.f32 16.0, %v1212
    %v1214 = vmul.f32 %v1213, 2.1237322e-06
    %v1215 = vadd.f32 %v1214, 0.00028619796
    %v1216 = vmul.f32 %v1213, %v1215
    %v1217 = vadd.f32 %v1216, 0.0036580483
    %v1218 = vmul.f32 %v1213, %v1217
    %v1219 = vadd.f32 %v1218, 0.05243302
    %v1220 = vmul.f32 %v1213, %v1219
    %v1221 = vadd.f32 %v1220, 0.18741608
    %v1222 = vmul.f32 %v1213, %v1221
    %v1223 = vadd.f32 %v1222, 1.1283791
    %v1224 = vmul.f32 %v1157, %v1223
    %v1225 = vmul.f32 %v1213, 3.8918573e-05
    %v1226 = vadd.f32 %v1225, 0.001143296
    %v1227 = vmul.f32 %v1213, %v1226
    %v1228 = vadd.f32 %v1227, 0.014752088
    %v1229 = vmul.f32 %v1213, %v1228
    %v1230 = vadd.f32 %v1229, 0.112945676
    %v1231 = vmul.f32 %v1213, %v1230
    %v1232 = vadd.f32 %v1231, 0.4994258
    %v1233 = vmul.f32 %v1213, %v1232
    %v1234 = vadd.f32 %v1233, 1.0
    %v1235 = vrcp.pop %v1234
    %v1236 = vmul.f32 %v1234, %v1235
    %v1237 = vsub.f32 1.0, %v1236
    %v1238 = vmul.f32 %v1235, %v1237
    %v1239 = vadd.f32 %v1235, %v1238
    %vm1240 = vweird.f32 %v1234
    %vm1241 = vweird.f32 %v1235
    %vm1242 = vmor %vm1240, %vm1241
    %v1243 = vsel %vm1242, %v1235, %v1239
    %v1244 = vand.u32 2147483647, %v1234
    %vm1245 = vcmp.eq.f32.partialorder %v1244, 8.507059e+37
    %v1246 = vand.u32 %v1234, 2147483648
    %v1247 = vor.u32 1.1754944e-38, %v1246
    %v1248 = vsel %vm1245, %v1247, %v1243
    %v1249 = vmul.f32 %v1224, %v1248
    %v1250 = vmin.f32 %v1249, 1.0
    %v1251 = vmax.f32 %v1250, -1.0
    %v1252 = vmul.f32 %v1158, %v1158
    %v1253 = vmin.f32 16.0, %v1252
    %v1254 = vmul.f32 %v1253, 2.1237322e-06
    %v1255 = vadd.f32 %v1254, 0.00028619796
    %v1256 = vmul.f32 %v1253, %v1255
    %v1257 = vadd.f32 %v1256, 0.0036580483
    %v1258 = vmul.f32 %v1253, %v1257
    %v1259 = vadd.f32 %v1258, 0.05243302
    %v1260 = vmul.f32 %v1253, %v1259
    %v1261 = vadd.f32 %v1260, 0.18741608
    %v1262 = vmul.f32 %v1253, %v1261
    %v1263 = vadd.f32 %v1262, 1.1283791
    %v1264 = vmul.f32 %v1158, %v1263
    %v1265 = vmul.f32 %v1253, 3.8918573e-05
    %v1266 = vadd.f32 %v1265, 0.001143296
    %v1267 = vmul.f32 %v1253, %v1266
    %v1268 = vadd.f32 %v1267, 0.014752088
    %v1269 = vmul.f32 %v1253, %v1268
    %v1270 = vadd.f32 %v1269, 0.112945676
    %v1271 = vmul.f32 %v1253, %v1270
    %v1272 = vadd.f32 %v1271, 0.4994258
    %v1273 = vmul.f32 %v1253, %v1272
    %v1274 = vadd.f32 %v1273, 1.0
    %v1275 = vrcp.pop %v1274
    %v1276 = vmul.f32 %v1274, %v1275
    %v1277 = vsub.f32 1.0, %v1276
    %v1278 = vmul.f32 %v1275, %v1277
    %v1279 = vadd.f32 %v1275, %v1278
    %vm1280 = vweird.f32 %v1274
    %vm1281 = vweird.f32 %v1275
    %vm1282 = vmor %vm1280, %vm1281
    %v1283 = vsel %vm1282, %v1275, %v1279
    %v1284 = vand.u32 2147483647, %v1274
    %vm1285 = vcmp.eq.f32.partialorder %v1284, 8.507059e+37
    %v1286 = vand.u32 %v1274, 2147483648
    %v1287 = vor.u32 1.1754944e-38, %v1286
    %v1288 = vsel %vm1285, %v1287, %v1283
    %v1289 = vmul.f32 %v1264, %v1288
    %v1290 = vmin.f32 %v1289, 1.0
    %v1291 = vmax.f32 %v1290, -1.0
    %v1292 = vmul.f32 %v1159, %v1159
    %v1293 = vmin.f32 16.0, %v1292
    %v1294 = vmul.f32 %v1293, 2.1237322e-06
    %v1295 = vadd.f32 %v1294, 0.00028619796
    %v1296 = vmul.f32 %v1293, %v1295
    %v1297 = vadd.f32 %v1296, 0.0036580483
    %v1298 = vmul.f32 %v1293, %v1297
    %v1299 = vadd.f32 %v1298, 0.05243302
    %v1300 = vmul.f32 %v1293, %v1299
    %v1301 = vadd.f32 %v1300, 0.18741608
    %v1302 = vmul.f32 %v1293, %v1301
    %v1303 = vadd.f32 %v1302, 1.1283791
    %v1304 = vmul.f32 %v1159, %v1303
    %v1305 = vmul.f32 %v1293, 3.8918573e-05
    %v1306 = vadd.f32 %v1305, 0.001143296
    %v1307 = vmul.f32 %v1293, %v1306
    %v1308 = vadd.f32 %v1307, 0.014752088
    %v1309 = vmul.f32 %v1293, %v1308
    %v1310 = vadd.f32 %v1309, 0.112945676
    %v1311 = vmul.f32 %v1293, %v1310
    %v1312 = vadd.f32 %v1311, 0.4994258
    %v1313 = vmul.f32 %v1293, %v1312
    %v1314 = vadd.f32 %v1313, 1.0
    %v1315 = vrcp.pop %v1314
    %v1316 = vmul.f32 %v1314, %v1315
    %v1317 = vsub.f32 1.0, %v1316
    %v1318 = vmul.f32 %v1315, %v1317
    %v1319 = vadd.f32 %v1315, %v1318
    %vm1320 = vweird.f32 %v1314
    %vm1321 = vweird.f32 %v1315
    %vm1322 = vmor %vm1320, %vm1321
    %v1323 = vsel %vm1322, %v1315, %v1319
    %v1324 = vand.u32 2147483647, %v1314
    %vm1325 = vcmp.eq.f32.partialorder %v1324, 8.507059e+37
    %v1326 = vand.u32 %v1314, 2147483648
    %v1327 = vor.u32 1.1754944e-38, %v1326
    %v1328 = vsel %vm1325, %v1327, %v1323
    %v1329 = vmul.f32 %v1304, %v1328
    %v1330 = vmin.f32 %v1329, 1.0
    %v1331 = vmax.f32 %v1330, -1.0
    %v1332 = vmul.f32 %v1160, %v1160
    %v1333 = vmin.f32 16.0, %v1332
    %v1334 = vmul.f32 %v1333, 2.1237322e-06
    %v1335 = vadd.f32 %v1334, 0.00028619796
    %v1336 = vmul.f32 %v1333, %v1335
    %v1337 = vadd.f32 %v1336, 0.0036580483
    %v1338 = vmul.f32 %v1333, %v1337
    %v1339 = vadd.f32 %v1338, 0.05243302
    %v1340 = vmul.f32 %v1333, %v1339
    %v1341 = vadd.f32 %v1340, 0.18741608
    %v1342 = vmul.f32 %v1333, %v1341
    %v1343 = vadd.f32 %v1342, 1.1283791
    %v1344 = vmul.f32 %v1160, %v1343
    %v1345 = vmul.f32 %v1333, 3.8918573e-05
    %v1346 = vadd.f32 %v1345, 0.001143296
    %v1347 = vmul.f32 %v1333, %v1346
    %v1348 = vadd.f32 %v1347, 0.014752088
    %v1349 = vmul.f32 %v1333, %v1348
    %v1350 = vadd.f32 %v1349, 0.112945676
    %v1351 = vmul.f32 %v1333, %v1350
    %v1352 = vadd.f32 %v1351, 0.4994258
    %v1353 = vmul.f32 %v1333, %v1352
    %v1354 = vadd.f32 %v1353, 1.0
    %v1355 = vrcp.pop %v1354
    %v1356 = vmul.f32 %v1354, %v1355
    %v1357 = vsub.f32 1.0, %v1356
    %v1358 = vmul.f32 %v1355, %v1357
    %v1359 = vadd.f32 %v1355, %v1358
    %vm1360 = vweird.f32 %v1354
    %vm1361 = vweird.f32 %v1355
    %vm1362 = vmor %vm1360, %vm1361
    %v1363 = vsel %vm1362, %v1355, %v1359
    %v1364 = vand.u32 2147483647, %v1354
    %vm1365 = vcmp.eq.f32.partialorder %v1364, 8.507059e+37
    %v1366 = vand.u32 %v1354, 2147483648
    %v1367 = vor.u32 1.1754944e-38, %v1366
    %v1368 = vsel %vm1365, %v1367, %v1363
    %v1369 = vmul.f32 %v1344, %v1368
    %v1370 = vmin.f32 %v1369, 1.0
    %v1371 = vmax.f32 %v1370, -1.0
    %v1372 = vmul.f32 %v1161, %v1161
    %v1373 = vmin.f32 16.0, %v1372
    %v1374 = vmul.f32 %v1373, 2.1237322e-06
    %v1375 = vadd.f32 %v1374, 0.00028619796
    %v1376 = vmul.f32 %v1373, %v1375
    %v1377 = vadd.f32 %v1376, 0.0036580483
    %v1378 = vmul.f32 %v1373, %v1377
    %v1379 = vadd.f32 %v1378, 0.05243302
    %v1380 = vmul.f32 %v1373, %v1379
    %v1381 = vadd.f32 %v1380, 0.18741608
    %v1382 = vmul.f32 %v1373, %v1381
    %v1383 = vadd.f32 %v1382, 1.1283791
    %v1384 = vmul.f32 %v1161, %v1383
    %v1385 = vmul.f32 %v1373, 3.8918573e-05
    %v1386 = vadd.f32 %v1385, 0.001143296
    %v1387 = vmul.f32 %v1373, %v1386
    %v1388 = vadd.f32 %v1387, 0.014752088
    %v1389 = vmul.f32 %v1373, %v1388
    %v1390 = vadd.f32 %v1389, 0.112945676
    %v1391 = vmul.f32 %v1373, %v1390
    %v1392 = vadd.f32 %v1391, 0.4994258
    %v1393 = vmul.f32 %v1373, %v1392
    %v1394 = vadd.f32 %v1393, 1.0
    %v1395 = vrcp.pop %v1394
    %v1396 = vmul.f32 %v1394, %v1395
    %v1397 = vsub.f32 1.0, %v1396
    %v1398 = vmul.f32 %v1395, %v1397
    %v1399 = vadd.f32 %v1395, %v1398
    %vm1400 = vweird.f32 %v1394
    %vm1401 = vweird.f32 %v1395
    %vm1402 = vmor %vm1400, %vm1401
    %v1403 = vsel %vm1402, %v1395, %v1399
    %v1404 = vand.u32 2147483647, %v1394
    %vm1405 = vcmp.eq.f32.partialorder %v1404, 8.507059e+37
    %v1406 = vand.u32 %v1394, 2147483648
    %v1407 = vor.u32 1.1754944e-38, %v1406
    %v1408 = vsel %vm1405, %v1407, %v1403
    %v1409 = vmul.f32 %v1384, %v1408
    %v1410 = vmin.f32 %v1409, 1.0
    %v1411 = vmax.f32 %v1410, -1.0
    %v1412 = vmul.f32 %v1162, %v1162
    %v1413 = vmin.f32 16.0, %v1412
    %v1414 = vmul.f32 %v1413, 2.1237322e-06
    %v1415 = vadd.f32 %v1414, 0.00028619796
    %v1416 = vmul.f32 %v1413, %v1415
    %v1417 = vadd.f32 %v1416, 0.0036580483
    %v1418 = vmul.f32 %v1413, %v1417
    %v1419 = vadd.f32 %v1418, 0.05243302
    %v1420 = vmul.f32 %v1413, %v1419
    %v1421 = vadd.f32 %v1420, 0.18741608
    %v1422 = vmul.f32 %v1413, %v1421
    %v1423 = vadd.f32 %v1422, 1.1283791
    %v1424 = vmul.f32 %v1162, %v1423
    %v1425 = vmul.f32 %v1413, 3.8918573e-05
    %v1426 = vadd.f32 %v1425, 0.001143296
    %v1427 = vmul.f32 %v1413, %v1426
    %v1428 = vadd.f32 %v1427, 0.014752088
    %v1429 = vmul.f32 %v1413, %v1428
    %v1430 = vadd.f32 %v1429, 0.112945676
    %v1431 = vmul.f32 %v1413, %v1430
    %v1432 = vadd.f32 %v1431, 0.4994258
    %v1433 = vmul.f32 %v1413, %v1432
    %v1434 = vadd.f32 %v1433, 1.0
    %v1435 = vrcp.pop %v1434
    %v1436 = vmul.f32 %v1434, %v1435
    %v1437 = vsub.f32 1.0, %v1436
    %v1438 = vmul.f32 %v1435, %v1437
    %v1439 = vadd.f32 %v1435, %v1438
    %vm1440 = vweird.f32 %v1434
    %vm1441 = vweird.f32 %v1435
    %vm1442 = vmor %vm1440, %vm1441
    %v1443 = vsel %vm1442, %v1435, %v1439
    %v1444 = vand.u32 2147483647, %v1434
    %vm1445 = vcmp.eq.f32.partialorder %v1444, 8.507059e+37
    %v1446 = vand.u32 %v1434, 2147483648
    %v1447 = vor.u32 1.1754944e-38, %v1446
    %v1448 = vsel %vm1445, %v1447, %v1443
    %v1449 = vmul.f32 %v1424, %v1448
    %v1450 = vmin.f32 %v1449, 1.0
    %v1451 = vmax.f32 %v1450, -1.0
    %v1452 = vmul.f32 %v1163, %v1163
    %v1453 = vmin.f32 16.0, %v1452
    %v1454 = vmul.f32 %v1453, 2.1237322e-06
    %v1455 = vadd.f32 %v1454, 0.00028619796
    %v1456 = vmul.f32 %v1453, %v1455
    %v1457 = vadd.f32 %v1456, 0.0036580483
    %v1458 = vmul.f32 %v1453, %v1457
    %v1459 = vadd.f32 %v1458, 0.05243302
    %v1460 = vmul.f32 %v1453, %v1459
    %v1461 = vadd.f32 %v1460, 0.18741608
    %v1462 = vmul.f32 %v1453, %v1461
    %v1463 = vadd.f32 %v1462, 1.1283791
    %v1464 = vmul.f32 %v1163, %v1463
    %v1465 = vmul.f32 %v1453, 3.8918573e-05
    %v1466 = vadd.f32 %v1465, 0.001143296
    %v1467 = vmul.f32 %v1453, %v1466
    %v1468 = vadd.f32 %v1467, 0.014752088
    %v1469 = vmul.f32 %v1453, %v1468
    %v1470 = vadd.f32 %v1469, 0.112945676
    %v1471 = vmul.f32 %v1453, %v1470
    %v1472 = vadd.f32 %v1471, 0.4994258
    %v1473 = vmul.f32 %v1453, %v1472
    %v1474 = vadd.f32 %v1473, 1.0
    %v1475 = vrcp.pop %v1474
    %v1476 = vmul.f32 %v1474, %v1475
    %v1477 = vsub.f32 1.0, %v1476
    %v1478 = vmul.f32 %v1475, %v1477
    %v1479 = vadd.f32 %v1475, %v1478
    %vm1480 = vweird.f32 %v1474
    %vm1481 = vweird.f32 %v1475
    %vm1482 = vmor %vm1480, %vm1481
    %v1483 = vsel %vm1482, %v1475, %v1479
    %v1484 = vand.u32 2147483647, %v1474
    %vm1485 = vcmp.eq.f32.partialorder %v1484, 8.507059e+37
    %v1486 = vand.u32 %v1474, 2147483648
    %v1487 = vor.u32 1.1754944e-38, %v1486
    %v1488 = vsel %vm1485, %v1487, %v1483
    %v1489 = vmul.f32 %v1464, %v1488
    %v1490 = vmin.f32 %v1489, 1.0
    %v1491 = vmax.f32 %v1490, -1.0
    %v1492 = vmul.f32 %v1164, %v1164
    %v1493 = vmin.f32 16.0, %v1492
    %v1494 = vmul.f32 %v1493, 2.1237322e-06
    %v1495 = vadd.f32 %v1494, 0.00028619796
    %v1496 = vmul.f32 %v1493, %v1495
    %v1497 = vadd.f32 %v1496, 0.0036580483
    %v1498 = vmul.f32 %v1493, %v1497
    %v1499 = vadd.f32 %v1498, 0.05243302
    %v1500 = vmul.f32 %v1493, %v1499
    %v1501 = vadd.f32 %v1500, 0.18741608
    %v1502 = vmul.f32 %v1493, %v1501
    %v1503 = vadd.f32 %v1502, 1.1283791
    %v1504 = vmul.f32 %v1164, %v1503
    %v1505 = vmul.f32 %v1493, 3.8918573e-05
    %v1506 = vadd.f32 %v1505, 0.001143296
    %v1507 = vmul.f32 %v1493, %v1506
    %v1508 = vadd.f32 %v1507, 0.014752088
    %v1509 = vmul.f32 %v1493, %v1508
    %v1510 = vadd.f32 %v1509, 0.112945676
    %v1511 = vmul.f32 %v1493, %v1510
    %v1512 = vadd.f32 %v1511, 0.4994258
    %v1513 = vmul.f32 %v1493, %v1512
    %v1514 = vadd.f32 %v1513, 1.0
    %v1515 = vrcp.pop %v1514
    %v1516 = vmul.f32 %v1514, %v1515
    %v1517 = vsub.f32 1.0, %v1516
    %v1518 = vmul.f32 %v1515, %v1517
    %v1519 = vadd.f32 %v1515, %v1518
    %vm1520 = vweird.f32 %v1514
    %vm1521 = vweird.f32 %v1515
    %vm1522 = vmor %vm1520, %vm1521
    %v1523 = vsel %vm1522, %v1515, %v1519
    %v1524 = vand.u32 2147483647, %v1514
    %vm1525 = vcmp.eq.f32.partialorder %v1524, 8.507059e+37
    %v1526 = vand.u32 %v1514, 2147483648
    %v1527 = vor.u32 1.1754944e-38, %v1526
    %v1528 = vsel %vm1525, %v1527, %v1523
    %v1529 = vmul.f32 %v1504, %v1528
    %v1530 = vmin.f32 %v1529, 1.0
    %v1531 = vmax.f32 %v1530, -1.0
    %v1532 = vmul.f32 %v1165, %v1165
    %v1533 = vmin.f32 16.0, %v1532
    %v1534 = vmul.f32 %v1533, 2.1237322e-06
    %v1535 = vadd.f32 %v1534, 0.00028619796
    %v1536 = vmul.f32 %v1533, %v1535
    %v1537 = vadd.f32 %v1536, 0.0036580483
    %v1538 = vmul.f32 %v1533, %v1537
    %v1539 = vadd.f32 %v1538, 0.05243302
    %v1540 = vmul.f32 %v1533, %v1539
    %v1541 = vadd.f32 %v1540, 0.18741608
    %v1542 = vmul.f32 %v1533, %v1541
    %v1543 = vadd.f32 %v1542, 1.1283791
    %v1544 = vmul.f32 %v1165, %v1543
    %v1545 = vmul.f32 %v1533, 3.8918573e-05
    %v1546 = vadd.f32 %v1545, 0.001143296
    %v1547 = vmul.f32 %v1533, %v1546
    %v1548 = vadd.f32 %v1547, 0.014752088
    %v1549 = vmul.f32 %v1533, %v1548
    %v1550 = vadd.f32 %v1549, 0.112945676
    %v1551 = vmul.f32 %v1533, %v1550
    %v1552 = vadd.f32 %v1551, 0.4994258
    %v1553 = vmul.f32 %v1533, %v1552
    %v1554 = vadd.f32 %v1553, 1.0
    %v1555 = vrcp.pop %v1554
    %v1556 = vmul.f32 %v1554, %v1555
    %v1557 = vsub.f32 1.0, %v1556
    %v1558 = vmul.f32 %v1555, %v1557
    %v1559 = vadd.f32 %v1555, %v1558
    %vm1560 = vweird.f32 %v1554
    %vm1561 = vweird.f32 %v1555
    %vm1562 = vmor %vm1560, %vm1561
    %v1563 = vsel %vm1562, %v1555, %v1559
    %v1564 = vand.u32 2147483647, %v1554
    %vm1565 = vcmp.eq.f32.partialorder %v1564, 8.507059e+37
    %v1566 = vand.u32 %v1554, 2147483648
    %v1567 = vor.u32 1.1754944e-38, %v1566
    %v1568 = vsel %vm1565, %v1567, %v1563
    %v1569 = vmul.f32 %v1544, %v1568
    %v1570 = vmin.f32 %v1569, 1.0
    %v1571 = vmax.f32 %v1570, -1.0
    %v1572 = vmul.f32 %v1166, %v1166
    %v1573 = vmin.f32 16.0, %v1572
    %v1574 = vmul.f32 %v1573, 2.1237322e-06
    %v1575 = vadd.f32 %v1574, 0.00028619796
    %v1576 = vmul.f32 %v1573, %v1575
    %v1577 = vadd.f32 %v1576, 0.0036580483
    %v1578 = vmul.f32 %v1573, %v1577
    %v1579 = vadd.f32 %v1578, 0.05243302
    %v1580 = vmul.f32 %v1573, %v1579
    %v1581 = vadd.f32 %v1580, 0.18741608
    %v1582 = vmul.f32 %v1573, %v1581
    %v1583 = vadd.f32 %v1582, 1.1283791
    %v1584 = vmul.f32 %v1166, %v1583
    %v1585 = vmul.f32 %v1573, 3.8918573e-05
    %v1586 = vadd.f32 %v1585, 0.001143296
    %v1587 = vmul.f32 %v1573, %v1586
    %v1588 = vadd.f32 %v1587, 0.014752088
    %v1589 = vmul.f32 %v1573, %v1588
    %v1590 = vadd.f32 %v1589, 0.112945676
    %v1591 = vmul.f32 %v1573, %v1590
    %v1592 = vadd.f32 %v1591, 0.4994258
    %v1593 = vmul.f32 %v1573, %v1592
    %v1594 = vadd.f32 %v1593, 1.0
    %v1595 = vrcp.pop %v1594
    %v1596 = vmul.f32 %v1594, %v1595
    %v1597 = vsub.f32 1.0, %v1596
    %v1598 = vmul.f32 %v1595, %v1597
    %v1599 = vadd.f32 %v1595, %v1598
    %vm1600 = vweird.f32 %v1594
    %vm1601 = vweird.f32 %v1595
    %vm1602 = vmor %vm1600, %vm1601
    %v1603 = vsel %vm1602, %v1595, %v1599
    %v1604 = vand.u32 2147483647, %v1594
    %vm1605 = vcmp.eq.f32.partialorder %v1604, 8.507059e+37
    %v1606 = vand.u32 %v1594, 2147483648
    %v1607 = vor.u32 1.1754944e-38, %v1606
    %v1608 = vsel %vm1605, %v1607, %v1603
    %v1609 = vmul.f32 %v1584, %v1608
    %v1610 = vmin.f32 %v1609, 1.0
    %v1611 = vmax.f32 %v1610, -1.0
    %v1612 = vmul.f32 %v1167, %v1167
    %v1613 = vmin.f32 16.0, %v1612
    %v1614 = vmul.f32 %v1613, 2.1237322e-06
    %v1615 = vadd.f32 %v1614, 0.00028619796
    %v1616 = vmul.f32 %v1613, %v1615
    %v1617 = vadd.f32 %v1616, 0.0036580483
    %v1618 = vmul.f32 %v1613, %v1617
    %v1619 = vadd.f32 %v1618, 0.05243302
    %v1620 = vmul.f32 %v1613, %v1619
    %v1621 = vadd.f32 %v1620, 0.18741608
    %v1622 = vmul.f32 %v1613, %v1621
    %v1623 = vadd.f32 %v1622, 1.1283791
    %v1624 = vmul.f32 %v1167, %v1623
    %v1625 = vmul.f32 %v1613, 3.8918573e-05
    %v1626 = vadd.f32 %v1625, 0.001143296
    %v1627 = vmul.f32 %v1613, %v1626
    %v1628 = vadd.f32 %v1627, 0.014752088
    %v1629 = vmul.f32 %v1613, %v1628
    %v1630 = vadd.f32 %v1629, 0.112945676
    %v1631 = vmul.f32 %v1613, %v1630
    %v1632 = vadd.f32 %v1631, 0.4994258
    %v1633 = vmul.f32 %v1613, %v1632
    %v1634 = vadd.f32 %v1633, 1.0
    %v1635 = vrcp.pop %v1634
    %v1636 = vmul.f32 %v1634, %v1635
    %v1637 = vsub.f32 1.0, %v1636
    %v1638 = vmul.f32 %v1635, %v1637
    %v1639 = vadd.f32 %v1635, %v1638
    %vm1640 = vweird.f32 %v1634
    %vm1641 = vweird.f32 %v1635
    %vm1642 = vmor %vm1640, %vm1641
    %v1643 = vsel %vm1642, %v1635, %v1639
    %v1644 = vand.u32 2147483647, %v1634
    %vm1645 = vcmp.eq.f32.partialorder %v1644, 8.507059e+37
    %v1646 = vand.u32 %v1634, 2147483648
    %v1647 = vor.u32 1.1754944e-38, %v1646
    %v1648 = vsel %vm1645, %v1647, %v1643
    %v1649 = vmul.f32 %v1624, %v1648
    %v1650 = vmin.f32 %v1649, 1.0
    %v1651 = vmax.f32 %v1650, -1.0
    %v1652 = vmul.f32 %v1168, %v1168
    %v1653 = vmin.f32 16.0, %v1652
    %v1654 = vmul.f32 %v1653, 2.1237322e-06
    %v1655 = vadd.f32 %v1654, 0.00028619796
    %v1656 = vmul.f32 %v1653, %v1655
    %v1657 = vadd.f32 %v1656, 0.0036580483
    %v1658 = vmul.f32 %v1653, %v1657
    %v1659 = vadd.f32 %v1658, 0.05243302
    %v1660 = vmul.f32 %v1653, %v1659
    %v1661 = vadd.f32 %v1660, 0.18741608
    %v1662 = vmul.f32 %v1653, %v1661
    %v1663 = vadd.f32 %v1662, 1.1283791
    %v1664 = vmul.f32 %v1168, %v1663
    %v1665 = vmul.f32 %v1653, 3.8918573e-05
    %v1666 = vadd.f32 %v1665, 0.001143296
    %v1667 = vmul.f32 %v1653, %v1666
    %v1668 = vadd.f32 %v1667, 0.014752088
    %v1669 = vmul.f32 %v1653, %v1668
    %v1670 = vadd.f32 %v1669, 0.112945676
    %v1671 = vmul.f32 %v1653, %v1670
    %v1672 = vadd.f32 %v1671, 0.4994258
    %v1673 = vmul.f32 %v1653, %v1672
    %v1674 = vadd.f32 %v1673, 1.0
    %v1675 = vrcp.pop %v1674
    %v1676 = vmul.f32 %v1674, %v1675
    %v1677 = vsub.f32 1.0, %v1676
    %v1678 = vmul.f32 %v1675, %v1677
    %v1679 = vadd.f32 %v1675, %v1678
    %vm1680 = vweird.f32 %v1674
    %vm1681 = vweird.f32 %v1675
    %vm1682 = vmor %vm1680, %vm1681
    %v1683 = vsel %vm1682, %v1675, %v1679
    %v1684 = vand.u32 2147483647, %v1674
    %vm1685 = vcmp.eq.f32.partialorder %v1684, 8.507059e+37
    %v1686 = vand.u32 %v1674, 2147483648
    %v1687 = vor.u32 1.1754944e-38, %v1686
    %v1688 = vsel %vm1685, %v1687, %v1683
    %v1689 = vmul.f32 %v1664, %v1688
    %v1690 = vmin.f32 %v1689, 1.0
    %v1691 = vmax.f32 %v1690, -1.0
    %v1692 = vmul.f32 %v1169, %v1169
    %v1693 = vmin.f32 16.0, %v1692
    %v1694 = vmul.f32 %v1693, 2.1237322e-06
    %v1695 = vadd.f32 %v1694, 0.00028619796
    %v1696 = vmul.f32 %v1693, %v1695
    %v1697 = vadd.f32 %v1696, 0.0036580483
    %v1698 = vmul.f32 %v1693, %v1697
    %v1699 = vadd.f32 %v1698, 0.05243302
    %v1700 = vmul.f32 %v1693, %v1699
    %v1701 = vadd.f32 %v1700, 0.18741608
    %v1702 = vmul.f32 %v1693, %v1701
    %v1703 = vadd.f32 %v1702, 1.1283791
    %v1704 = vmul.f32 %v1169, %v1703
    %v1705 = vmul.f32 %v1693, 3.8918573e-05
    %v1706 = vadd.f32 %v1705, 0.001143296
    %v1707 = vmul.f32 %v1693, %v1706
    %v1708 = vadd.f32 %v1707, 0.014752088
    %v1709 = vmul.f32 %v1693, %v1708
    %v1710 = vadd.f32 %v1709, 0.112945676
    %v1711 = vmul.f32 %v1693, %v1710
    %v1712 = vadd.f32 %v1711, 0.4994258
    %v1713 = vmul.f32 %v1693, %v1712
    %v1714 = vadd.f32 %v1713, 1.0
    %v1715 = vrcp.pop %v1714
    %v1716 = vmul.f32 %v1714, %v1715
    %v1717 = vsub.f32 1.0, %v1716
    %v1718 = vmul.f32 %v1715, %v1717
    %v1719 = vadd.f32 %v1715, %v1718
    %vm1720 = vweird.f32 %v1714
    %vm1721 = vweird.f32 %v1715
    %vm1722 = vmor %vm1720, %vm1721
    %v1723 = vsel %vm1722, %v1715, %v1719
    %v1724 = vand.u32 2147483647, %v1714
    %vm1725 = vcmp.eq.f32.partialorder %v1724, 8.507059e+37
    %v1726 = vand.u32 %v1714, 2147483648
    %v1727 = vor.u32 1.1754944e-38, %v1726
    %v1728 = vsel %vm1725, %v1727, %v1723
    %v1729 = vmul.f32 %v1704, %v1728
    %v1730 = vmin.f32 %v1729, 1.0
    %v1731 = vmax.f32 %v1730, -1.0
    %v1732 = vmul.f32 %v1170, %v1170
    %v1733 = vmin.f32 16.0, %v1732
    %v1734 = vmul.f32 %v1733, 2.1237322e-06
    %v1735 = vadd.f32 %v1734, 0.00028619796
    %v1736 = vmul.f32 %v1733, %v1735
    %v1737 = vadd.f32 %v1736, 0.0036580483
    %v1738 = vmul.f32 %v1733, %v1737
    %v1739 = vadd.f32 %v1738, 0.05243302
    %v1740 = vmul.f32 %v1733, %v1739
    %v1741 = vadd.f32 %v1740, 0.18741608
    %v1742 = vmul.f32 %v1733, %v1741
    %v1743 = vadd.f32 %v1742, 1.1283791
    %v1744 = vmul.f32 %v1170, %v1743
    %v1745 = vmul.f32 %v1733, 3.8918573e-05
    %v1746 = vadd.f32 %v1745, 0.001143296
    %v1747 = vmul.f32 %v1733, %v1746
    %v1748 = vadd.f32 %v1747, 0.014752088
    %v1749 = vmul.f32 %v1733, %v1748
    %v1750 = vadd.f32 %v1749, 0.112945676
    %v1751 = vmul.f32 %v1733, %v1750
    %v1752 = vadd.f32 %v1751, 0.4994258
    %v1753 = vmul.f32 %v1733, %v1752
    %v1754 = vadd.f32 %v1753, 1.0
    %v1755 = vrcp.pop %v1754
    %v1756 = vmul.f32 %v1754, %v1755
    %v1757 = vsub.f32 1.0, %v1756
    %v1758 = vmul.f32 %v1755, %v1757
    %v1759 = vadd.f32 %v1755, %v1758
    %vm1760 = vweird.f32 %v1754
    %vm1761 = vweird.f32 %v1755
    %vm1762 = vmor %vm1760, %vm1761
    %v1763 = vsel %vm1762, %v1755, %v1759
    %v1764 = vand.u32 2147483647, %v1754
    %vm1765 = vcmp.eq.f32.partialorder %v1764, 8.507059e+37
    %v1766 = vand.u32 %v1754, 2147483648
    %v1767 = vor.u32 1.1754944e-38, %v1766
    %v1768 = vsel %vm1765, %v1767, %v1763
    %v1769 = vmul.f32 %v1744, %v1768
    %v1770 = vmin.f32 %v1769, 1.0
    %v1771 = vmax.f32 %v1770, -1.0
    %v1772 = vmul.f32 %v1171, %v1171
    %v1773 = vmin.f32 16.0, %v1772
    %v1774 = vmul.f32 %v1773, 2.1237322e-06
    %v1775 = vadd.f32 %v1774, 0.00028619796
    %v1776 = vmul.f32 %v1773, %v1775
    %v1777 = vadd.f32 %v1776, 0.0036580483
    %v1778 = vmul.f32 %v1773, %v1777
    %v1779 = vadd.f32 %v1778, 0.05243302
    %v1780 = vmul.f32 %v1773, %v1779
    %v1781 = vadd.f32 %v1780, 0.18741608
    %v1782 = vmul.f32 %v1773, %v1781
    %v1783 = vadd.f32 %v1782, 1.1283791
    %v1784 = vmul.f32 %v1171, %v1783
    %v1785 = vmul.f32 %v1773, 3.8918573e-05
    %v1786 = vadd.f32 %v1785, 0.001143296
    %v1787 = vmul.f32 %v1773, %v1786
    %v1788 = vadd.f32 %v1787, 0.014752088
    %v1789 = vmul.f32 %v1773, %v1788
    %v1790 = vadd.f32 %v1789, 0.112945676
    %v1791 = vmul.f32 %v1773, %v1790
    %v1792 = vadd.f32 %v1791, 0.4994258
    %v1793 = vmul.f32 %v1773, %v1792
    %v1794 = vadd.f32 %v1793, 1.0
    %v1795 = vrcp.pop %v1794
    %v1796 = vmul.f32 %v1794, %v1795
    %v1797 = vsub.f32 1.0, %v1796
    %v1798 = vmul.f32 %v1795, %v1797
    %v1799 = vadd.f32 %v1795, %v1798
    %vm1800 = vweird.f32 %v1794
    %vm1801 = vweird.f32 %v1795
    %vm1802 = vmor %vm1800, %vm1801
    %v1803 = vsel %vm1802, %v1795, %v1799
    %v1804 = vand.u32 2147483647, %v1794
    %vm1805 = vcmp.eq.f32.partialorder %v1804, 8.507059e+37
    %v1806 = vand.u32 %v1794, 2147483648
    %v1807 = vor.u32 1.1754944e-38, %v1806
    %v1808 = vsel %vm1805, %v1807, %v1803
    %v1809 = vmul.f32 %v1784, %v1808
    %v1810 = vmin.f32 %v1809, 1.0
    %v1811 = vmax.f32 %v1810, -1.0
    %v1812 = vadd.f32 %v1211, 1.0
    %v1813 = vadd.f32 %v1251, 1.0
    %v1814 = vadd.f32 %v1291, 1.0
    %v1815 = vadd.f32 %v1331, 1.0
    %v1816 = vadd.f32 %v1371, 1.0
    %v1817 = vadd.f32 %v1411, 1.0
    %v1818 = vadd.f32 %v1451, 1.0
    %v1819 = vadd.f32 %v1491, 1.0
    %v1820 = vadd.f32 %v1531, 1.0
    %v1821 = vadd.f32 %v1571, 1.0
    %v1822 = vadd.f32 %v1611, 1.0
    %v1823 = vadd.f32 %v1651, 1.0
    %v1824 = vadd.f32 %v1691, 1.0
    %v1825 = vadd.f32 %v1731, 1.0
    %v1826 = vadd.f32 %v1771, 1.0
    %v1827 = vadd.f32 %v1811, 1.0
    %v1828 = vmul.f32 %v1140, %v1812
    %v1829 = vmul.f32 %v1141, %v1813
    %v1830 = vmul.f32 %v1142, %v1814
    %v1831 = vmul.f32 %v1143, %v1815
    %v1832 = vmul.f32 %v1144, %v1816
    %v1833 = vmul.f32 %v1145, %v1817
    %v1834 = vmul.f32 %v1146, %v1818
    %v1835 = vmul.f32 %v1147, %v1819
    %v1836 = vmul.f32 %v1148, %v1820
    %v1837 = vmul.f32 %v1149, %v1821
    %v1838 = vmul.f32 %v1150, %v1822
    %v1839 = vmul.f32 %v1151, %v1823
    %v1840 = vmul.f32 %v1152, %v1824
    %v1841 = vmul.f32 %v1153, %v1825
    %v1842 = vmul.f32 %v1154, %v1826
    %v1843 = vmul.f32 %v1155, %v1827
    %v1844 = vld [vmem:[%s5] sm:$0x1]
    %s1845 = sld [smem:[#allocation2]]
    %v1846 = vstv %s1845
    %1847 = vmatpush.msra.mxu0 %v1843
    %1848 = vmatpush.msra.mxu0 %v1842
    %1849 = vmatpush.msra.mxu0 %v1841
    %1850 = vmatpush.msra.mxu0 %v1840
    %1851 = vmatpush.msra.mxu0 %v1839
    %1852 = vmatpush.msra.mxu0 %v1838
    %1853 = vmatpush.msra.mxu0 %v1837
    %1854 = vmatpush.msra.mxu0 %v1836
    %1855 = vmatpush.msra.mxu0 %v1835
    %1856 = vmatpush.msra.mxu0 %v1834
    %1857 = vmatpush.msra.mxu0 %v1833
    %1858 = vmatpush.msra.mxu0 %v1832
    %1859 = vmatpush.msra.mxu0 %v1831
    %1860 = vmatpush.msra.mxu0 %v1830
    %1861 = vmatpush.msra.mxu0 %v1829
    %1862 = vmatpush.msra.mxu0 %v1828
    %1863 = vmatmul.f32.gmra.mxu0 %v1844
    %v1864 = vpop.f32.mrf.mxu0
    %v1865 = vadd.f32 %v1846, %v1864
    %1866 = vdwg.mxu0
    %1867 = vst [vmem:[#allocation3] sm:$0x1] %v1865
    // Predicated region
    $region30: #{tpu_custom_call.1} parent=1 // pred_check
      _
    $region31: #{tpu_custom_call.1} parent=1 // pred_check_branch
      %1869 = sbr.rel (0) target = $region33
    $region32: #{tpu_custom_call.1} parent=1 // pred_region
      %1871 = vsyncadd [#allocation4], 0
      %s1873 = sshll.u32 [#allocation3], 4
      %s1874 = int_to_ptr.vmem [resolvable:$true] %s1873
      %s1875 = sshll.u32 %s7, 4
      %s1876 = int_to_ptr.hbm [resolvable:$true] %s1875
      %1878 = dma.vmem_to_hbm [thread:$0]  %s1874, 16, %s1876, [#allocation4]
    $region33: #{tpu_custom_call.1} parent=1 // pred_fallthru
      _
    // Predicated region
    $region34: #{tpu_custom_call.1} parent=1 // pred_check
      _
    $region35: #{tpu_custom_call.1} parent=1 // pred_check_branch
      %1880 = sbr.rel (0) target = $region37
    $region36: #{tpu_custom_call.1} parent=1 // pred_region
      %1882 = dma.done [#allocation4], 16
    $region37: #{tpu_custom_call.1} parent=1 // pred_fallthru
      _
    %1883 = vsyncpa [#allocation4], 1

</llo_original>
